<compile_context>
chip_gen: v7x
topology: tpu7x:2x2x1
jax: 0.10.0
libtpu: 0.0.40
codegen_flags: <defaults>
</compile_context>

<pallas_src>
import jax
import jax.numpy as jnp
from jax.experimental import pallas as pl
from jax.experimental.pallas import tpu as pltpu


K_RAW = 7 * 7 * 64      # 3136 = torch fc1 input features
K_PAD = 3328            # padded to 2 x 1664 (1664 = 13*128, lane-aligned K tiles)
TK = 1664               # FC1 K tile
H1 = 1024               # fc1 output features
H_BLK = 512             # per-TensorCore half of H1
O_RAW = 10
O_PAD = 128             # lane-dense fc2 output width (sliced back to 10 outside)


def _round_up(x, m):
    return ((x + m - 1) // m) * m


# ---------- fused conv (im2col-matmul) + 2x2 MaxPool + LeakyReLU(0.2), M-gridded ----------

def _conv_pool_kernel(patches_ref, w_ref, b_ref, out_ref):
    # patches_ref: (4, tm, F) bf16 -- 4 pool-window offsets for tm pooled positions
    # w_ref:       (F, Cout)  bf16
    # b_ref:       (1, Cout)  f32
    # out_ref:     (tm, Cout) bf16
    w = w_ref[...]
    y0 = jnp.dot(patches_ref[0], w, preferred_element_type=jnp.float32)
    y1 = jnp.dot(patches_ref[1], w, preferred_element_type=jnp.float32)
    y2 = jnp.dot(patches_ref[2], w, preferred_element_type=jnp.float32)
    y3 = jnp.dot(patches_ref[3], w, preferred_element_type=jnp.float32)
    # 2x2 max-pool = max over the 4 offsets.  Valid to pool before bias+activation:
    # bias is a per-channel constant and LeakyReLU is monotone, so
    # LeakyReLU(max(conv)+b) == MaxPool(LeakyReLU(conv+b)).
    m = jnp.maximum(jnp.maximum(y0, y1), jnp.maximum(y2, y3)) + b_ref[...]
    out_ref[...] = jnp.maximum(m, 0.2 * m).astype(out_ref.dtype)      # LeakyReLU(0.2)


def conv_lrelu_pool(patches, w_mat, b_row, *, tm_max=512, out_dtype=jnp.bfloat16):
    """patches: (4, N*P, F) bf16 -> (N*P, Cout) bf16, M-gridded over pooled rows."""
    four, NP, F = patches.shape
    assert four == 4
    Cout = w_mat.shape[1]
    tm = min(tm_max, _round_up(NP, 8))       # sublane-aligned row tile
    n_m = pl.cdiv(NP, tm)
    NPp = n_m * tm
    if NPp != NP:
        patches = jnp.pad(patches, ((0, 0), (0, NPp - NP), (0, 0)))
    out = pl.pallas_call(
        _conv_pool_kernel,
        out_shape=jax.ShapeDtypeStruct((NPp, Cout), out_dtype),
        grid_spec=pltpu.PrefetchScalarGridSpec(
            num_scalar_prefetch=0,
            grid=(n_m,),
            in_specs=[
                pl.BlockSpec((4, tm, F), lambda i: (0, i, 0)),
                pl.BlockSpec((F, Cout), lambda i: (0, 0)),
                pl.BlockSpec((1, Cout), lambda i: (0, 0)),
            ],
            out_specs=pl.BlockSpec((tm, Cout), lambda i: (i, 0)),
        ),
        compiler_params=pltpu.CompilerParams(
            dimension_semantics=("parallel",)),          # M axis -> v7x megacore
    )(patches, w_mat, b_row)
    return out[:NP]


# -------------------------------------- FC head kernel --------------------------------------

def _fc_kernel(x_ref, w1_ref, b1_ref, w2_ref, out_ref, acc_ref):
    # grid = (H1 // H_BLK, K_PAD // TK); axis 0 is parallel over fc1-output halves
    # (splits the dominant fc1_w HBM stream across v7x's two TCs), axis 1 is the K
    # reduction.  bf16 x bf16 -> f32 accumulation on the MXU.
    k = pl.program_id(1)

    @pl.when(k == 0)
    def _():
        acc_ref[...] = jnp.zeros_like(acc_ref)

    acc_ref[...] += jnp.dot(x_ref[...], w1_ref[...],
                            preferred_element_type=jnp.float32)

    @pl.when(k == pl.num_programs(1) - 1)
    def _():
        h = acc_ref[...] + b1_ref[...]
        h = jnp.maximum(h, 0.2 * h)                       # LeakyReLU(0.2), f32
        # Partial fc2 logits for this H1-half (lane-dense 128-wide store); the tiny
        # sum over halves + bias + sigmoid epilogue runs in XLA outside.
        out_ref[...] = jnp.dot(h.astype(jnp.bfloat16), w2_ref[...],
                               preferred_element_type=jnp.float32)


def fc_head(x_flat, w1, b1, w2, b2, *, tk=TK, h_blk=H_BLK):
    N, Kp = x_flat.shape
    H = w1.shape[1]
    Op = w2.shape[1]
    assert Kp % tk == 0 and H % h_blk == 0
    n_h = H // h_blk
    partial = pl.pallas_call(
        _fc_kernel,
        out_shape=jax.ShapeDtypeStruct((n_h, N, Op), jnp.float32),
        grid_spec=pltpu.PrefetchScalarGridSpec(
            num_scalar_prefetch=0,
            grid=(n_h, Kp // tk),                         # (2 halves, 2 K-steps)
            in_specs=[
                pl.BlockSpec((N, tk), lambda h, k: (0, k)),
                pl.BlockSpec((tk, h_blk), lambda h, k: (k, h)),
                pl.BlockSpec((1, h_blk), lambda h, k: (0, h)),
                pl.BlockSpec((h_blk, Op), lambda h, k: (h, 0)),
            ],
            out_specs=pl.BlockSpec((None, N, Op), lambda h, k: (h, 0, 0)),
            scratch_shapes=[pltpu.VMEM((N, h_blk), jnp.float32)],
        ),
        compiler_params=pltpu.CompilerParams(
            dimension_semantics=("parallel", "arbitrary")),
    )(x_flat, w1, b1, w2)
    logits = partial.sum(axis=0)[:, :b2.shape[1]] + b2    # ~40-flop XLA epilogue
    return jax.nn.sigmoid(logits)


# ---------------------------------------- JAX glue ------------------------------------------

def im2col_pool_grouped(x_nhwc, ksize=5, pad=2):
    """im2col for a 'same' 5x5 conv, with conv-output positions grouped by their 2x2
    max-pool window offset.  Returns (4, N*(H//2)*(W//2), C*25); feature order is
    (c_in, kh, kw), matching a torch conv weight reshaped to (Cout, Cin*25).
    Rows within each offset block are ordered (n, hp, wp).  Runs in the input dtype
    (bf16) so the 25x-expanded patches are written to HBM only once, at half width."""
    N, H, W, C = x_nhwc.shape
    xp = jnp.pad(x_nhwc, ((0, 0), (pad, pad), (pad, pad), (0, 0)))
    cols = [xp[:, kh:kh + H, kw:kw + W, :]
            for kh in range(ksize) for kw in range(ksize)]
    patches = jnp.stack(cols, axis=-1)                       # (N,H,W,C,25)
    patches = patches.reshape(N, H, W, C * ksize * ksize)    # feature = c*25+kh*5+kw
    Hp, Wp = H // 2, W // 2
    patches = patches.reshape(N, Hp, 2, Wp, 2, C * ksize * ksize)
    patches = patches.transpose(2, 4, 0, 1, 3, 5)            # (2, 2, N, Hp, Wp, F)
    return patches.reshape(4, N * Hp * Wp, C * ksize * ksize)


def init_params(key):
    ks = jax.random.split(key, 8)
    s = 0.05
    # torch-layout parameters
    w1c = jax.random.normal(ks[0], (32, 1, 5, 5), jnp.float32) * s
    b1c = jax.random.normal(ks[1], (32,), jnp.float32) * s
    w2c = jax.random.normal(ks[2], (64, 32, 5, 5), jnp.float32) * s
    b2c = jax.random.normal(ks[3], (64,), jnp.float32) * s
    fc1w = jax.random.normal(ks[4], (H1, K_RAW), jnp.float32) * s
    fc1b = jax.random.normal(ks[5], (H1,), jnp.float32) * s
    fc2w = jax.random.normal(ks[6], (O_RAW, H1), jnp.float32) * s
    fc2b = jax.random.normal(ks[7], (O_RAW,), jnp.float32) * s

    # fc1 repack: torch flattens NCHW, input index f = c*49 + p.  Our kernels flatten the
    # pooled conv2 output NHWC-style, g = p*64 + c (pure reshape, no runtime transpose),
    # so permute the weight rows once here:  W_k[p*64+c, :] = fc1w[:, c*49+p].
    fc1w_k = jnp.transpose(fc1w.reshape(H1, 64, 49), (2, 1, 0)).reshape(K_RAW, H1)
    fc1w_k = jnp.pad(fc1w_k, ((0, K_PAD - K_RAW), (0, 0))).astype(jnp.bfloat16)

    # fc2: transpose and pad output 10 -> 128 (lane-dense store; sliced outside).
    fc2w_k = jnp.pad(fc2w.T, ((0, 0), (0, O_PAD - O_RAW))).astype(jnp.bfloat16)

    return dict(
        w1=w1c.reshape(32, 25).T.astype(jnp.bfloat16),        # (25, 32)    bf16
        b1=b1c.reshape(1, 32),                                # f32
        w2=w2c.reshape(64, 32 * 25).T.astype(jnp.bfloat16),   # (800, 64)   bf16
        b2=b2c.reshape(1, 64),                                # f32
        fc1_w=fc1w_k,                                         # (3328, 1024) bf16
        fc1_b=fc1b.reshape(1, H1),                            # f32
        fc2_w=fc2w_k,                                         # (1024, 128)  bf16
        fc2_b=fc2b.reshape(1, O_RAW),                         # f32
    )


def discriminator_forward(x_nchw, params):
    N = x_nchw.shape[0]
    # NCHW -> NHWC and cast to bf16 BEFORE the 25x im2col expansion.
    x = jnp.transpose(x_nchw, (0, 2, 3, 1)).astype(jnp.bfloat16)      # (N,28,28,1)

    # Conv2d(1,32,5,p=2) + LeakyReLU(0.2) + MaxPool(2,2)
    p1 = im2col_pool_grouped(x)                                       # (4, N*196, 25) bf16
    h1 = conv_lrelu_pool(p1, params["w1"], params["b1"])              # (N*196, 32)    bf16
    h1 = h1.reshape(N, 14, 14, 32)

    # Conv2d(32,64,5,p=2) + LeakyReLU(0.2) + MaxPool(2,2)
    p2 = im2col_pool_grouped(h1)                                      # (4, N*49, 800) bf16
    h2 = conv_lrelu_pool(p2, params["w2"], params["b2"])              # (N*49, 64)     bf16

    # Pure-reshape flatten (NHWC order); torch's NCHW-view ordering is folded into the
    # fc1 weight permutation at init.  Pad K 3136 -> 3328 for the FC head.
    flat = h2.reshape(N, 49 * 64)
    flat = jnp.pad(flat, ((0, 0), (0, K_PAD - K_RAW)))                # bf16

    # Linear(3136,1024) + LeakyReLU(0.2) + Linear(1024,10) + Sigmoid
    return fc_head(flat, params["fc1_w"], params["fc1_b"],
                   params["fc2_w"], params["fc2_b"])


if __name__ == "__main__":
    key = jax.random.PRNGKey(0)
    k_x, k_p = jax.random.split(key)
    x = jax.random.normal(k_x, (2, 1, 28, 28), jnp.float32)   # NCHW, like PyTorch
    params = init_params(k_p)

    out = jax.block_until_ready(discriminator_forward(x, params))

    assert out.shape == (2, 10), out.shape
    assert bool(jnp.all(jnp.isfinite(out)))
    assert bool(jnp.all((out >= 0.0) & (out <= 1.0)))         # sigmoid output range
    print("KERNEL_OK")
</pallas_src>

<mosaic_0001>
module attributes {stable_mosaic.version = 11 : i64} {
  func.func @_conv_pool_kernel(%arg0: i32, %arg1: memref<4x392x25xbf16, #tpu.memory_space<vmem>>, %arg2: memref<25x32xbf16, #tpu.memory_space<vmem>>, %arg3: memref<1x32xf32, #tpu.memory_space<vmem>>, %arg4: memref<392x32xbf16, #tpu.memory_space<vmem>>) attributes {dimension_semantics = [#tpu.dimension_semantics<parallel>], iteration_bounds = array<i64: 1>, scalar_prefetch = 0 : i64, scratch_operands = 0 : i64, tpu.core_type = #tpu.core_type<tc>, window_params = [{transform_indices = @transform_0, window_bounds = array<i64: 4, 392, 25>}, {pipeline_mode = #tpu.pipeline_mode<synchronous>, transform_indices = @transform_1, window_bounds = array<i64: 25, 32>}, {pipeline_mode = #tpu.pipeline_mode<synchronous>, transform_indices = @transform_2, window_bounds = array<i64: 1, 32>}, {transform_indices = @transform_3, window_bounds = array<i64: 392, 32>}]} {
    %c0 = arith.constant 0 : index
    %c0_0 = arith.constant 0 : index
    %0 = vector.load %arg2[%c0, %c0_0] : memref<25x32xbf16, #tpu.memory_space<vmem>>, vector<25x32xbf16>
    %c0_1 = arith.constant 0 : index
    %c0_2 = arith.constant 0 : index
    %c0_3 = arith.constant 0 : index
    %1 = vector.load %arg1[%c0_1, %c0_2, %c0_3] : memref<4x392x25xbf16, #tpu.memory_space<vmem>>, vector<1x392x25xbf16>
    %2 = vector.shape_cast %1 : vector<1x392x25xbf16> to vector<392x25xbf16>
    %cst = arith.constant dense<0.000000e+00> : vector<392x32xf32>
    %3 = tpu.matmul %2, %0, %cst {dimension_numbers = #tpu.dot_dimension_numbers<[1], [0], [0], [1], [0, 0, 1, 1], [], []>} : vector<392x25xbf16>, vector<25x32xbf16>, vector<392x32xf32> -> vector<392x32xf32>
    %c1 = arith.constant 1 : index
    %c0_4 = arith.constant 0 : index
    %c0_5 = arith.constant 0 : index
    %4 = vector.load %arg1[%c1, %c0_4, %c0_5] : memref<4x392x25xbf16, #tpu.memory_space<vmem>>, vector<1x392x25xbf16>
    %5 = vector.shape_cast %4 : vector<1x392x25xbf16> to vector<392x25xbf16>
    %cst_6 = arith.constant dense<0.000000e+00> : vector<392x32xf32>
    %6 = tpu.matmul %5, %0, %cst_6 {dimension_numbers = #tpu.dot_dimension_numbers<[1], [0], [0], [1], [0, 0, 1, 1], [], []>} : vector<392x25xbf16>, vector<25x32xbf16>, vector<392x32xf32> -> vector<392x32xf32>
    %c2 = arith.constant 2 : index
    %c0_7 = arith.constant 0 : index
    %c0_8 = arith.constant 0 : index
    %7 = vector.load %arg1[%c2, %c0_7, %c0_8] : memref<4x392x25xbf16, #tpu.memory_space<vmem>>, vector<1x392x25xbf16>
    %8 = vector.shape_cast %7 : vector<1x392x25xbf16> to vector<392x25xbf16>
    %cst_9 = arith.constant dense<0.000000e+00> : vector<392x32xf32>
    %9 = tpu.matmul %8, %0, %cst_9 {dimension_numbers = #tpu.dot_dimension_numbers<[1], [0], [0], [1], [0, 0, 1, 1], [], []>} : vector<392x25xbf16>, vector<25x32xbf16>, vector<392x32xf32> -> vector<392x32xf32>
    %c3 = arith.constant 3 : index
    %c0_10 = arith.constant 0 : index
    %c0_11 = arith.constant 0 : index
    %10 = vector.load %arg1[%c3, %c0_10, %c0_11] : memref<4x392x25xbf16, #tpu.memory_space<vmem>>, vector<1x392x25xbf16>
    %11 = vector.shape_cast %10 : vector<1x392x25xbf16> to vector<392x25xbf16>
    %cst_12 = arith.constant dense<0.000000e+00> : vector<392x32xf32>
    %12 = tpu.matmul %11, %0, %cst_12 {dimension_numbers = #tpu.dot_dimension_numbers<[1], [0], [0], [1], [0, 0, 1, 1], [], []>} : vector<392x25xbf16>, vector<25x32xbf16>, vector<392x32xf32> -> vector<392x32xf32>
    %13 = arith.maximumf %3, %6 : vector<392x32xf32>
    %14 = arith.maximumf %9, %12 : vector<392x32xf32>
    %15 = arith.maximumf %13, %14 : vector<392x32xf32>
    %c0_13 = arith.constant 0 : index
    %c0_14 = arith.constant 0 : index
    %16 = vector.load %arg3[%c0_13, %c0_14] : memref<1x32xf32, #tpu.memory_space<vmem>>, vector<1x32xf32>
    %17 = vector.broadcast %16 : vector<1x32xf32> to vector<392x32xf32>
    %18 = arith.addf %15, %17 : vector<392x32xf32>
    %cst_15 = arith.constant 2.000000e-01 : f32
    %19 = vector.broadcast %cst_15 : f32 to vector<392x32xf32>
    %20 = arith.mulf %19, %18 : vector<392x32xf32>
    %21 = arith.maximumf %18, %20 : vector<392x32xf32>
    %22 = arith.truncf %21 : vector<392x32xf32> to vector<392x32xbf16>
    %c0_16 = arith.constant 0 : index
    %c0_17 = arith.constant 0 : index
    %23 = vector.load %arg4[%c0_16, %c0_17] : memref<392x32xbf16, #tpu.memory_space<vmem>>, vector<392x32xbf16>
    tpu.vector_store %arg4[%c0_16, %c0_17], %22 {strides = array<i32>} : memref<392x32xbf16, #tpu.memory_space<vmem>>, vector<392x32xbf16>,
    return
  }
  func.func @transform_0(%arg0: i32) -> (i32, i32, i32) {
    %c0_i32 = arith.constant 0 : i32
    %c0_i32_0 = arith.constant 0 : i32
    %c0_i32_1 = arith.constant 0 : i32
    return %c0_i32, %arg0, %c0_i32_0 : i32, i32, i32
  }
  func.func @transform_1(%arg0: i32) -> (i32, i32) {
    %c0_i32 = arith.constant 0 : i32
    %c0_i32_0 = arith.constant 0 : i32
    %c0_i32_1 = arith.constant 0 : i32
    return %c0_i32, %c0_i32_0 : i32, i32
  }
  func.func @transform_2(%arg0: i32) -> (i32, i32) {
    %c0_i32 = arith.constant 0 : i32
    %c0_i32_0 = arith.constant 0 : i32
    %c0_i32_1 = arith.constant 0 : i32
    return %c0_i32, %c0_i32_0 : i32, i32
  }
  func.func @transform_3(%arg0: i32) -> (i32, i32) {
    %c0_i32 = arith.constant 0 : i32
    %c0_i32_0 = arith.constant 0 : i32
    return %arg0, %c0_i32 : i32, i32
  }
}

</mosaic_0001>

<llo_original>
// kernel: tpu_custom_call.1
$region0: #{tpu_custom_call.1}
  #allocation0 [shape = 'u32[]', space=smem, size = 0x4, offset = 0x4, fixed_abs, tag = 'smem constant byte address 0x4 - core index']
  #allocation1 [shape = 'u32[144,128]{1,0:T(1,128)}', space=vmem, size = 0x12000, scoped, tag = 'internal scratch']
  %s0 = inlined_call_operand.vmem [shape: bf16[4,392,25], index: 0, kind: input, shape index: {}]
  %s1 = inlined_call_operand.vmem [shape: bf16[25,32], index: 1, kind: input, shape index: {}]
  %s2 = inlined_call_operand.vmem [shape: f32[1,32], index: 2, kind: input, shape index: {}]
  %s3 = inlined_call_operand.vmem [shape: bf16[392,32], index: 3, kind: output, shape index: {}]
  %s4 = sld [smem:[#allocation0]]
  $region22: #{tpu_custom_call.1} parent=0
    _
  %s6 = ssub.s32 1, %s4
  %s7 = scalar_select 0, %s6, %s4
  // Predicated region
  $region2: #{tpu_custom_call.1} parent=0 // pred_check
    _
  $region3: #{tpu_custom_call.1} parent=0 // pred_check_branch
    %9 = sbr.rel (0) target = $region5
  $region4: #{tpu_custom_call.1} parent=0 // pred_region
    _
  $region5: #{tpu_custom_call.1} parent=0 // pred_fallthru
    _
  // Predicated region
  $region6: #{tpu_custom_call.1} parent=0 // pred_check
    _
  $region7: #{tpu_custom_call.1} parent=0 // pred_check_branch
    %11 = sbr.rel (0) target = $region9
  $region8: #{tpu_custom_call.1} parent=0 // pred_region
    _
  $region9: #{tpu_custom_call.1} parent=0 // pred_fallthru
    _
  // Predicated region
  $region10: #{tpu_custom_call.1} parent=0 // pred_check
    _
  $region11: #{tpu_custom_call.1} parent=0 // pred_check_branch
    %13 = sbr.rel (0) target = $region13
  $region12: #{tpu_custom_call.1} parent=0 // pred_region
    _
  $region13: #{tpu_custom_call.1} parent=0 // pred_fallthru
    _
  %v15 = vld [vmem:[%s1] sm:$0xf]
  %v16 = vld [vmem:[%s1 + $0x4] sm:$0xf]
  %v17 = vld [vmem:[%s1 + $0x8] sm:$0xf]
  %v18 = vld [vmem:[%s1 + $0xc] sm:$0x1]
  %v19 = vld [vmem:[%s0] sm:$0xf]
  %v20 = vld [vmem:[%s0 + $0x4] sm:$0xf]
  %v21 = vld [vmem:[%s0 + $0x8] sm:$0xf]
  %v22 = vld [vmem:[%s0 + $0xc] sm:$0xf]
  %v23 = vld [vmem:[%s0 + $0x10] sm:$0xf]
  %v24 = vld [vmem:[%s0 + $0x14] sm:$0xf]
  %v25 = vld [vmem:[%s0 + $0x18] sm:$0xf]
  %v26 = vld [vmem:[%s0 + $0x1c] sm:$0xf]
  %v27 = vld [vmem:[%s0 + $0x20] sm:$0xf]
  %v28 = vld [vmem:[%s0 + $0x24] sm:$0xf]
  %v29 = vld [vmem:[%s0 + $0x28] sm:$0xf]
  %v30 = vld [vmem:[%s0 + $0x2c] sm:$0xf]
  %v31 = vld [vmem:[%s0 + $0x30] sm:$0xf]
  %v32 = vld [vmem:[%s0 + $0x34] sm:$0xf]
  %v33 = vld [vmem:[%s0 + $0x38] sm:$0xf]
  %v34 = vld [vmem:[%s0 + $0x3c] sm:$0xf]
  %v35 = vld [vmem:[%s0 + $0x40] sm:$0xf]
  %v36 = vld [vmem:[%s0 + $0x44] sm:$0xf]
  %v37 = vld [vmem:[%s0 + $0x48] sm:$0xf]
  %v38 = vld [vmem:[%s0 + $0x4c] sm:$0xf]
  %v39 = vld [vmem:[%s0 + $0x50] sm:$0xf]
  %v40 = vld [vmem:[%s0 + $0x54] sm:$0xf]
  %v41 = vld [vmem:[%s0 + $0x58] sm:$0xf]
  %v42 = vld [vmem:[%s0 + $0x5c] sm:$0xf]
  %v43 = vld [vmem:[%s0 + $0x60] sm:$0xf]
  %v44 = vld [vmem:[%s0 + $0x64] sm:$0xf]
  %v45 = vld [vmem:[%s0 + $0x68] sm:$0xf]
  %v46 = vld [vmem:[%s0 + $0x6c] sm:$0xf]
  %v47 = vld [vmem:[%s0 + $0x70] sm:$0xf]
  %v48 = vld [vmem:[%s0 + $0x74] sm:$0xf]
  %v49 = vld [vmem:[%s0 + $0x78] sm:$0xf]
  %v50 = vld [vmem:[%s0 + $0x7c] sm:$0xf]
  %v51 = vld [vmem:[%s0 + $0x80] sm:$0xf]
  %v52 = vld [vmem:[%s0 + $0x84] sm:$0xf]
  %v53 = vld [vmem:[%s0 + $0x88] sm:$0xf]
  %v54 = vld [vmem:[%s0 + $0x8c] sm:$0xf]
  %v55 = vld [vmem:[%s0 + $0x90] sm:$0xf]
  %v56 = vld [vmem:[%s0 + $0x94] sm:$0xf]
  %v57 = vld [vmem:[%s0 + $0x98] sm:$0xf]
  %v58 = vld [vmem:[%s0 + $0x9c] sm:$0xf]
  %v59 = vld [vmem:[%s0 + $0xa0] sm:$0xf]
  %v60 = vld [vmem:[%s0 + $0xa4] sm:$0xf]
  %v61 = vld [vmem:[%s0 + $0xa8] sm:$0xf]
  %v62 = vld [vmem:[%s0 + $0xac] sm:$0xf]
  %v63 = vld [vmem:[%s0 + $0xb0] sm:$0xf]
  %v64 = vld [vmem:[%s0 + $0xb4] sm:$0xf]
  %v65 = vld [vmem:[%s0 + $0xb8] sm:$0xf]
  %v66 = vld [vmem:[%s0 + $0xbc] sm:$0xf]
  %v67 = vld [vmem:[%s0 + $0xc0] sm:$0xf]
  %v117 = vunpack.c.l.b16 %v19
  %v118 = vunpack.c.l.b16 %v20
  %v119 = vunpack.c.l.b16 %v21
  %v120 = vunpack.c.l.b16 %v22
  %v121 = vunpack.c.l.b16 %v23
  %v122 = vunpack.c.l.b16 %v24
  %v123 = vunpack.c.l.b16 %v25
  %v124 = vunpack.c.l.b16 %v26
  %v125 = vunpack.c.l.b16 %v27
  %v126 = vunpack.c.l.b16 %v28
  %v127 = vunpack.c.l.b16 %v29
  %v128 = vunpack.c.l.b16 %v30
  %v129 = vunpack.c.l.b16 %v31
  %v130 = vunpack.c.l.b16 %v32
  %v131 = vunpack.c.l.b16 %v33
  %v132 = vunpack.c.l.b16 %v34
  %v133 = vunpack.c.l.b16 %v35
  %v134 = vunpack.c.l.b16 %v36
  %v135 = vunpack.c.l.b16 %v37
  %v136 = vunpack.c.l.b16 %v38
  %v137 = vunpack.c.l.b16 %v39
  %v138 = vunpack.c.l.b16 %v40
  %v139 = vunpack.c.l.b16 %v41
  %v140 = vunpack.c.l.b16 %v42
  %v141 = vunpack.c.l.b16 %v43
  %v142 = vunpack.c.l.b16 %v44
  %v143 = vunpack.c.l.b16 %v45
  %v144 = vunpack.c.l.b16 %v46
  %v145 = vunpack.c.l.b16 %v47
  %v146 = vunpack.c.l.b16 %v48
  %v147 = vunpack.c.l.b16 %v49
  %v148 = vunpack.c.l.b16 %v50
  %v149 = vunpack.c.l.b16 %v51
  %v150 = vunpack.c.l.b16 %v52
  %v151 = vunpack.c.l.b16 %v53
  %v152 = vunpack.c.l.b16 %v54
  %v153 = vunpack.c.l.b16 %v55
  %v154 = vunpack.c.l.b16 %v56
  %v155 = vunpack.c.l.b16 %v57
  %v156 = vunpack.c.l.b16 %v58
  %v157 = vunpack.c.l.b16 %v59
  %v158 = vunpack.c.l.b16 %v60
  %v159 = vunpack.c.l.b16 %v61
  %v160 = vunpack.c.l.b16 %v62
  %v161 = vunpack.c.l.b16 %v63
  %v162 = vunpack.c.l.b16 %v64
  %v163 = vunpack.c.l.b16 %v65
  %v164 = vunpack.c.l.b16 %v66
  %v165 = vunpack.c.l.b16 %v67
  %v166 = vpack.c.b16 %v118, %v117
  %v167 = vpack.c.b16 %v120, %v119
  %v168 = vpack.c.b16 %v122, %v121
  %v169 = vpack.c.b16 %v124, %v123
  %v170 = vpack.c.b16 %v126, %v125
  %v171 = vpack.c.b16 %v128, %v127
  %v172 = vpack.c.b16 %v130, %v129
  %v173 = vpack.c.b16 %v132, %v131
  %v174 = vpack.c.b16 %v134, %v133
  %v175 = vpack.c.b16 %v136, %v135
  %v176 = vpack.c.b16 %v138, %v137
  %v177 = vpack.c.b16 %v140, %v139
  %v178 = vpack.c.b16 %v142, %v141
  %v179 = vpack.c.b16 %v144, %v143
  %v180 = vpack.c.b16 %v146, %v145
  %v181 = vpack.c.b16 %v148, %v147
  %v182 = vpack.c.b16 %v150, %v149
  %v183 = vpack.c.b16 %v152, %v151
  %v184 = vpack.c.b16 %v154, %v153
  %v185 = vpack.c.b16 %v156, %v155
  %v186 = vpack.c.b16 %v158, %v157
  %v187 = vpack.c.b16 %v160, %v159
  %v188 = vpack.c.b16 %v162, %v161
  %v189 = vpack.c.b16 %v164, %v163
  %v190 = vpack.c.b16 %v165, %v165
  %v195 = vunpack.c.l.b16 %v15
  %v196 = vunpack.c.l.b16 %v16
  %v197 = vunpack.c.l.b16 %v17
  %v198 = vunpack.c.l.b16 %v18
  %v199 = vpack.c.b16 %v196, %v195
  %v200 = vpack.c.b16 %v198, %v197
  %vm202 = vcmask 203776
  %v204 = vsel %vm202, %v166, 0
  %v207 = vsel %vm202, %v167, 0
  %v210 = vsel %vm202, %v168, 0
  %v213 = vsel %vm202, %v169, 0
  %v216 = vsel %vm202, %v170, 0
  %v219 = vsel %vm202, %v171, 0
  %v222 = vsel %vm202, %v172, 0
  %v225 = vsel %vm202, %v173, 0
  %v228 = vsel %vm202, %v174, 0
  %v231 = vsel %vm202, %v175, 0
  %v234 = vsel %vm202, %v176, 0
  %v237 = vsel %vm202, %v177, 0
  %v240 = vsel %vm202, %v178, 0
  %v243 = vsel %vm202, %v179, 0
  %v246 = vsel %vm202, %v180, 0
  %v249 = vsel %vm202, %v181, 0
  %v252 = vsel %vm202, %v182, 0
  %v255 = vsel %vm202, %v183, 0
  %v258 = vsel %vm202, %v184, 0
  %v261 = vsel %vm202, %v185, 0
  %v264 = vsel %vm202, %v186, 0
  %v267 = vsel %vm202, %v187, 0
  %v270 = vsel %vm202, %v188, 0
  %v273 = vsel %vm202, %v189, 0
  %v276 = vsel %vm202, %v190, 0
  %vm278 = vcmask 1043456
  %vm279 = vcmask 1044480
  %v280 = vsel %vm278, 4294967295, 65535
  %v281 = vsel %vm279, %v280, 0
  %v283 = vand.u32 %v200, %v281
  %285 = vmatprep.subr.bf16.mxu0 0
  %286 = vmatpush1.bf16.msra.mxu0 %v199
  %287 = vmatprep.subr.bf16.mxu0 0
  %288 = vmatpush1.bf16.msra.mxu0 %v283
  %289 = vmatprep.subr.bf16.mxu0 0
  %290 = vmatpush1.bf16.msra.mxu0 0
  %291 = vmatprep.subr.bf16.mxu0 0
  %292 = vmatpush1.bf16.msra.mxu0 0
  %293 = vmatprep.subr.bf16.mxu0 0
  %294 = vmatpush1.bf16.msra.mxu0 0
  %295 = vmatprep.subr.bf16.mxu0 0
  %296 = vmatpush1.bf16.msra.mxu0 0
  %297 = vmatprep.subr.bf16.mxu0 0
  %298 = vmatpush1.bf16.msra.mxu0 0
  %299 = vmatprep.subr.bf16.mxu0 0
  %300 = vmatpush1.bf16.msra.mxu0 0
  %301 = vmatprep.subr.bf16.mxu0 0
  %302 = vmatpush1.bf16.msra.mxu0 0
  %303 = vmatprep.subr.bf16.mxu0 0
  %304 = vmatpush1.bf16.msra.mxu0 0
  %305 = vmatprep.subr.bf16.mxu0 0
  %306 = vmatpush1.bf16.msra.mxu0 0
  %307 = vmatprep.subr.bf16.mxu0 0
  %308 = vmatpush1.bf16.msra.mxu0 0
  %309 = vmatprep.subr.bf16.mxu0 0
  %310 = vmatpush1.bf16.msra.mxu0 0
  %311 = vmatprep.subr.bf16.mxu0 0
  %312 = vmatpush1.bf16.msra.mxu0 0
  %313 = vmatprep.subr.bf16.mxu0 0
  %314 = vmatpush1.bf16.msra.mxu0 0
  %315 = vmatprep.subr.bf16.mxu0 0
  %316 = vmatpush1.bf16.msra.mxu0 0
  %317 = vmatprep.mubr.bf16.mxu0 0
  %318 = vmatmul.mubr.bf16.gmra.mrb[0].mxu0 %v204
  %v319 = vpop.f32.mrb[0].mxu0
  %v320 = vadd.f32 0.0, %v319
  %v321 = vpop.f32.mrb[0].mxu0
  %v322 = vpop.f32.mrb[0].mxu0
  %v323 = vadd.f32 0.0, %v322
  %v324 = vpop.f32.mrb[0].mxu0
  %325 = vmatprep.mubr.bf16.mxu0 0
  %326 = vmatmul.mubr.bf16.gmra.mrb[0].mxu0 %v207
  %v327 = vpop.f32.mrb[0].mxu0
  %v328 = vadd.f32 0.0, %v327
  %v329 = vpop.f32.mrb[0].mxu0
  %v330 = vpop.f32.mrb[0].mxu0
  %v331 = vadd.f32 0.0, %v330
  %v332 = vpop.f32.mrb[0].mxu0
  %333 = vmatprep.mubr.bf16.mxu0 0
  %334 = vmatmul.mubr.bf16.gmra.mrb[0].mxu0 %v210
  %v335 = vpop.f32.mrb[0].mxu0
  %v336 = vadd.f32 0.0, %v335
  %v337 = vpop.f32.mrb[0].mxu0
  %v338 = vpop.f32.mrb[0].mxu0
  %v339 = vadd.f32 0.0, %v338
  %v340 = vpop.f32.mrb[0].mxu0
  %341 = vmatprep.mubr.bf16.mxu0 0
  %342 = vmatmul.mubr.bf16.gmra.mrb[0].mxu0 %v213
  %v343 = vpop.f32.mrb[0].mxu0
  %v344 = vadd.f32 0.0, %v343
  %v345 = vpop.f32.mrb[0].mxu0
  %v346 = vpop.f32.mrb[0].mxu0
  %v347 = vadd.f32 0.0, %v346
  %v348 = vpop.f32.mrb[0].mxu0
  %349 = vmatprep.mubr.bf16.mxu0 0
  %350 = vmatmul.mubr.bf16.gmra.mrb[0].mxu0 %v216
  %v351 = vpop.f32.mrb[0].mxu0
  %v352 = vadd.f32 0.0, %v351
  %v353 = vpop.f32.mrb[0].mxu0
  %v354 = vpop.f32.mrb[0].mxu0
  %v355 = vadd.f32 0.0, %v354
  %v356 = vpop.f32.mrb[0].mxu0
  %357 = vmatprep.mubr.bf16.mxu0 0
  %358 = vmatmul.mubr.bf16.gmra.mrb[0].mxu0 %v219
  %v359 = vpop.f32.mrb[0].mxu0
  %v360 = vadd.f32 0.0, %v359
  %v361 = vpop.f32.mrb[0].mxu0
  %v362 = vpop.f32.mrb[0].mxu0
  %v363 = vadd.f32 0.0, %v362
  %v364 = vpop.f32.mrb[0].mxu0
  %365 = vmatprep.mubr.bf16.mxu0 0
  %366 = vmatmul.mubr.bf16.gmra.mrb[0].mxu0 %v222
  %v367 = vpop.f32.mrb[0].mxu0
  %v368 = vadd.f32 0.0, %v367
  %v369 = vpop.f32.mrb[0].mxu0
  %v370 = vpop.f32.mrb[0].mxu0
  %v371 = vadd.f32 0.0, %v370
  %v372 = vpop.f32.mrb[0].mxu0
  %373 = vmatprep.mubr.bf16.mxu0 0
  %374 = vmatmul.mubr.bf16.gmra.mrb[0].mxu0 %v225
  %v375 = vpop.f32.mrb[0].mxu0
  %v376 = vadd.f32 0.0, %v375
  %v377 = vpop.f32.mrb[0].mxu0
  %v378 = vpop.f32.mrb[0].mxu0
  %v379 = vadd.f32 0.0, %v378
  %v380 = vpop.f32.mrb[0].mxu0
  %381 = vmatprep.mubr.bf16.mxu0 0
  %382 = vmatmul.mubr.bf16.gmra.mrb[0].mxu0 %v228
  %v383 = vpop.f32.mrb[0].mxu0
  %v384 = vadd.f32 0.0, %v383
  %v385 = vpop.f32.mrb[0].mxu0
  %v386 = vpop.f32.mrb[0].mxu0
  %v387 = vadd.f32 0.0, %v386
  %v388 = vpop.f32.mrb[0].mxu0
  %389 = vmatprep.mubr.bf16.mxu0 0
  %390 = vmatmul.mubr.bf16.gmra.mrb[0].mxu0 %v231
  %v391 = vpop.f32.mrb[0].mxu0
  %v392 = vadd.f32 0.0, %v391
  %v393 = vpop.f32.mrb[0].mxu0
  %v394 = vpop.f32.mrb[0].mxu0
  %v395 = vadd.f32 0.0, %v394
  %v396 = vpop.f32.mrb[0].mxu0
  %397 = vmatprep.mubr.bf16.mxu0 0
  %398 = vmatmul.mubr.bf16.gmra.mrb[0].mxu0 %v234
  %v399 = vpop.f32.mrb[0].mxu0
  %v400 = vadd.f32 0.0, %v399
  %v401 = vpop.f32.mrb[0].mxu0
  %v402 = vpop.f32.mrb[0].mxu0
  %v403 = vadd.f32 0.0, %v402
  %v404 = vpop.f32.mrb[0].mxu0
  %405 = vmatprep.mubr.bf16.mxu0 0
  %406 = vmatmul.mubr.bf16.gmra.mrb[0].mxu0 %v237
  %v407 = vpop.f32.mrb[0].mxu0
  %v408 = vadd.f32 0.0, %v407
  %v409 = vpop.f32.mrb[0].mxu0
  %v410 = vpop.f32.mrb[0].mxu0
  %v411 = vadd.f32 0.0, %v410
  %v412 = vpop.f32.mrb[0].mxu0
  %413 = vmatprep.mubr.bf16.mxu0 0
  %414 = vmatmul.mubr.bf16.gmra.mrb[0].mxu0 %v240
  %v415 = vpop.f32.mrb[0].mxu0
  %v416 = vadd.f32 0.0, %v415
  %v417 = vpop.f32.mrb[0].mxu0
  %v418 = vpop.f32.mrb[0].mxu0
  %v419 = vadd.f32 0.0, %v418
  %v420 = vpop.f32.mrb[0].mxu0
  %421 = vmatprep.mubr.bf16.mxu0 0
  %422 = vmatmul.mubr.bf16.gmra.mrb[0].mxu0 %v243
  %v423 = vpop.f32.mrb[0].mxu0
  %v424 = vadd.f32 0.0, %v423
  %v425 = vpop.f32.mrb[0].mxu0
  %v426 = vpop.f32.mrb[0].mxu0
  %v427 = vadd.f32 0.0, %v426
  %v428 = vpop.f32.mrb[0].mxu0
  %429 = vmatprep.mubr.bf16.mxu0 0
  %430 = vmatmul.mubr.bf16.gmra.mrb[0].mxu0 %v246
  %v431 = vpop.f32.mrb[0].mxu0
  %v432 = vadd.f32 0.0, %v431
  %v433 = vpop.f32.mrb[0].mxu0
  %v434 = vpop.f32.mrb[0].mxu0
  %v435 = vadd.f32 0.0, %v434
  %v436 = vpop.f32.mrb[0].mxu0
  %437 = vmatprep.mubr.bf16.mxu0 0
  %438 = vmatmul.mubr.bf16.gmra.mrb[0].mxu0 %v249
  %v439 = vpop.f32.mrb[0].mxu0
  %v440 = vadd.f32 0.0, %v439
  %v441 = vpop.f32.mrb[0].mxu0
  %v442 = vpop.f32.mrb[0].mxu0
  %v443 = vadd.f32 0.0, %v442
  %v444 = vpop.f32.mrb[0].mxu0
  %445 = vmatprep.mubr.bf16.mxu0 0
  %446 = vmatmul.mubr.bf16.gmra.mrb[0].mxu0 %v252
  %v447 = vpop.f32.mrb[0].mxu0
  %v448 = vadd.f32 0.0, %v447
  %v449 = vpop.f32.mrb[0].mxu0
  %v450 = vpop.f32.mrb[0].mxu0
  %v451 = vadd.f32 0.0, %v450
  %v452 = vpop.f32.mrb[0].mxu0
  %453 = vmatprep.mubr.bf16.mxu0 0
  %454 = vmatmul.mubr.bf16.gmra.mrb[0].mxu0 %v255
  %v455 = vpop.f32.mrb[0].mxu0
  %v456 = vadd.f32 0.0, %v455
  %v457 = vpop.f32.mrb[0].mxu0
  %v458 = vpop.f32.mrb[0].mxu0
  %v459 = vadd.f32 0.0, %v458
  %v460 = vpop.f32.mrb[0].mxu0
  %461 = vmatprep.mubr.bf16.mxu0 0
  %462 = vmatmul.mubr.bf16.gmra.mrb[0].mxu0 %v258
  %v463 = vpop.f32.mrb[0].mxu0
  %v464 = vadd.f32 0.0, %v463
  %v465 = vpop.f32.mrb[0].mxu0
  %v466 = vpop.f32.mrb[0].mxu0
  %v467 = vadd.f32 0.0, %v466
  %v468 = vpop.f32.mrb[0].mxu0
  %469 = vmatprep.mubr.bf16.mxu0 0
  %470 = vmatmul.mubr.bf16.gmra.mrb[0].mxu0 %v261
  %v471 = vpop.f32.mrb[0].mxu0
  %v472 = vadd.f32 0.0, %v471
  %v473 = vpop.f32.mrb[0].mxu0
  %v474 = vpop.f32.mrb[0].mxu0
  %v475 = vadd.f32 0.0, %v474
  %v476 = vpop.f32.mrb[0].mxu0
  %477 = vmatprep.mubr.bf16.mxu0 0
  %478 = vmatmul.mubr.bf16.gmra.mrb[0].mxu0 %v264
  %v479 = vpop.f32.mrb[0].mxu0
  %v480 = vadd.f32 0.0, %v479
  %v481 = vpop.f32.mrb[0].mxu0
  %v482 = vpop.f32.mrb[0].mxu0
  %v483 = vadd.f32 0.0, %v482
  %v484 = vpop.f32.mrb[0].mxu0
  %485 = vmatprep.mubr.bf16.mxu0 0
  %486 = vmatmul.mubr.bf16.gmra.mrb[0].mxu0 %v267
  %v487 = vpop.f32.mrb[0].mxu0
  %v488 = vadd.f32 0.0, %v487
  %v489 = vpop.f32.mrb[0].mxu0
  %v490 = vpop.f32.mrb[0].mxu0
  %v491 = vadd.f32 0.0, %v490
  %v492 = vpop.f32.mrb[0].mxu0
  %493 = vmatprep.mubr.bf16.mxu0 0
  %494 = vmatmul.mubr.bf16.gmra.mrb[0].mxu0 %v270
  %v495 = vpop.f32.mrb[0].mxu0
  %v496 = vadd.f32 0.0, %v495
  %v497 = vpop.f32.mrb[0].mxu0
  %v498 = vpop.f32.mrb[0].mxu0
  %v499 = vadd.f32 0.0, %v498
  %v500 = vpop.f32.mrb[0].mxu0
  %501 = vmatprep.mubr.bf16.mxu0 0
  %502 = vmatmul.mubr.bf16.gmra.mrb[0].mxu0 %v273
  %v503 = vpop.f32.mrb[0].mxu0
  %v504 = vadd.f32 0.0, %v503
  %v505 = vpop.f32.mrb[0].mxu0
  %v506 = vpop.f32.mrb[0].mxu0
  %v507 = vadd.f32 0.0, %v506
  %v508 = vpop.f32.mrb[0].mxu0
  %509 = vmatprep.mubr.bf16.mxu0 0
  %510 = vmatmul.mubr.bf16.gmra.mrb[0].mxu0 %v276
  %v511 = vpop.f32.mrb[0].mxu0
  %v512 = vadd.f32 0.0, %v511
  %v513 = vpop.f32.mrb[0].mxu0
  %v514 = vpop.f32.mrb[0].mxu0
  %v515 = vpop.f32.mrb[0].mxu0
  %516 = vdwg.mxu0
  %s517 = scalar_lea.vmem %s0, 196
  %v518 = vld [vmem:[%s517] sm:$0xf]
  %v519 = vld [vmem:[%s517 + $0x4] sm:$0xf]
  %v520 = vld [vmem:[%s517 + $0x8] sm:$0xf]
  %v521 = vld [vmem:[%s517 + $0xc] sm:$0xf]
  %v522 = vld [vmem:[%s517 + $0x10] sm:$0xf]
  %v523 = vld [vmem:[%s517 + $0x14] sm:$0xf]
  %v524 = vld [vmem:[%s517 + $0x18] sm:$0xf]
  %v525 = vld [vmem:[%s517 + $0x1c] sm:$0xf]
  %v526 = vld [vmem:[%s517 + $0x20] sm:$0xf]
  %v527 = vld [vmem:[%s517 + $0x24] sm:$0xf]
  %v528 = vld [vmem:[%s517 + $0x28] sm:$0xf]
  %v529 = vld [vmem:[%s517 + $0x2c] sm:$0xf]
  %v530 = vld [vmem:[%s517 + $0x30] sm:$0xf]
  %v531 = vld [vmem:[%s517 + $0x34] sm:$0xf]
  %v532 = vld [vmem:[%s517 + $0x38] sm:$0xf]
  %v533 = vld [vmem:[%s517 + $0x3c] sm:$0xf]
  %v534 = vld [vmem:[%s517 + $0x40] sm:$0xf]
  %v535 = vld [vmem:[%s517 + $0x44] sm:$0xf]
  %v536 = vld [vmem:[%s517 + $0x48] sm:$0xf]
  %v537 = vld [vmem:[%s517 + $0x4c] sm:$0xf]
  %v538 = vld [vmem:[%s517 + $0x50] sm:$0xf]
  %v539 = vld [vmem:[%s517 + $0x54] sm:$0xf]
  %v540 = vld [vmem:[%s517 + $0x58] sm:$0xf]
  %v541 = vld [vmem:[%s517 + $0x5c] sm:$0xf]
  %v542 = vld [vmem:[%s517 + $0x60] sm:$0xf]
  %v543 = vld [vmem:[%s517 + $0x64] sm:$0xf]
  %v544 = vld [vmem:[%s517 + $0x68] sm:$0xf]
  %v545 = vld [vmem:[%s517 + $0x6c] sm:$0xf]
  %v546 = vld [vmem:[%s517 + $0x70] sm:$0xf]
  %v547 = vld [vmem:[%s517 + $0x74] sm:$0xf]
  %v548 = vld [vmem:[%s517 + $0x78] sm:$0xf]
  %v549 = vld [vmem:[%s517 + $0x7c] sm:$0xf]
  %v550 = vld [vmem:[%s517 + $0x80] sm:$0xf]
  %v551 = vld [vmem:[%s517 + $0x84] sm:$0xf]
  %v552 = vld [vmem:[%s517 + $0x88] sm:$0xf]
  %v553 = vld [vmem:[%s517 + $0x8c] sm:$0xf]
  %v554 = vld [vmem:[%s517 + $0x90] sm:$0xf]
  %v555 = vld [vmem:[%s517 + $0x94] sm:$0xf]
  %v556 = vld [vmem:[%s517 + $0x98] sm:$0xf]
  %v557 = vld [vmem:[%s517 + $0x9c] sm:$0xf]
  %v558 = vld [vmem:[%s517 + $0xa0] sm:$0xf]
  %v559 = vld [vmem:[%s517 + $0xa4] sm:$0xf]
  %v560 = vld [vmem:[%s517 + $0xa8] sm:$0xf]
  %v561 = vld [vmem:[%s517 + $0xac] sm:$0xf]
  %v562 = vld [vmem:[%s517 + $0xb0] sm:$0xf]
  %v563 = vld [vmem:[%s517 + $0xb4] sm:$0xf]
  %v564 = vld [vmem:[%s517 + $0xb8] sm:$0xf]
  %v565 = vld [vmem:[%s517 + $0xbc] sm:$0xf]
  %v566 = vld [vmem:[%s517 + $0xc0] sm:$0xf]
  %v616 = vunpack.c.l.b16 %v518
  %v617 = vunpack.c.l.b16 %v519
  %v618 = vunpack.c.l.b16 %v520
  %v619 = vunpack.c.l.b16 %v521
  %v620 = vunpack.c.l.b16 %v522
  %v621 = vunpack.c.l.b16 %v523
  %v622 = vunpack.c.l.b16 %v524
  %v623 = vunpack.c.l.b16 %v525
  %v624 = vunpack.c.l.b16 %v526
  %v625 = vunpack.c.l.b16 %v527
  %v626 = vunpack.c.l.b16 %v528
  %v627 = vunpack.c.l.b16 %v529
  %v628 = vunpack.c.l.b16 %v530
  %v629 = vunpack.c.l.b16 %v531
  %v630 = vunpack.c.l.b16 %v532
  %v631 = vunpack.c.l.b16 %v533
  %v632 = vunpack.c.l.b16 %v534
  %v633 = vunpack.c.l.b16 %v535
  %v634 = vunpack.c.l.b16 %v536
  %v635 = vunpack.c.l.b16 %v537
  %v636 = vunpack.c.l.b16 %v538
  %v637 = vunpack.c.l.b16 %v539
  %v638 = vunpack.c.l.b16 %v540
  %v639 = vunpack.c.l.b16 %v541
  %v640 = vunpack.c.l.b16 %v542
  %v641 = vunpack.c.l.b16 %v543
  %v642 = vunpack.c.l.b16 %v544
  %v643 = vunpack.c.l.b16 %v545
  %v644 = vunpack.c.l.b16 %v546
  %v645 = vunpack.c.l.b16 %v547
  %v646 = vunpack.c.l.b16 %v548
  %v647 = vunpack.c.l.b16 %v549
  %v648 = vunpack.c.l.b16 %v550
  %v649 = vunpack.c.l.b16 %v551
  %v650 = vunpack.c.l.b16 %v552
  %v651 = vunpack.c.l.b16 %v553
  %v652 = vunpack.c.l.b16 %v554
  %v653 = vunpack.c.l.b16 %v555
  %v654 = vunpack.c.l.b16 %v556
  %v655 = vunpack.c.l.b16 %v557
  %v656 = vunpack.c.l.b16 %v558
  %v657 = vunpack.c.l.b16 %v559
  %v658 = vunpack.c.l.b16 %v560
  %v659 = vunpack.c.l.b16 %v561
  %v660 = vunpack.c.l.b16 %v562
  %v661 = vunpack.c.l.b16 %v563
  %v662 = vunpack.c.l.b16 %v564
  %v663 = vunpack.c.l.b16 %v565
  %v664 = vunpack.c.l.b16 %v566
  %v665 = vpack.c.b16 %v617, %v616
  %v666 = vpack.c.b16 %v619, %v618
  %v667 = vpack.c.b16 %v621, %v620
  %v668 = vpack.c.b16 %v623, %v622
  %v669 = vpack.c.b16 %v625, %v624
  %v670 = vpack.c.b16 %v627, %v626
  %v671 = vpack.c.b16 %v629, %v628
  %v672 = vpack.c.b16 %v631, %v630
  %v673 = vpack.c.b16 %v633, %v632
  %v674 = vpack.c.b16 %v635, %v634
  %v675 = vpack.c.b16 %v637, %v636
  %v676 = vpack.c.b16 %v639, %v638
  %v677 = vpack.c.b16 %v641, %v640
  %v678 = vpack.c.b16 %v643, %v642
  %v679 = vpack.c.b16 %v645, %v644
  %v680 = vpack.c.b16 %v647, %v646
  %v681 = vpack.c.b16 %v649, %v648
  %v682 = vpack.c.b16 %v651, %v650
  %v683 = vpack.c.b16 %v653, %v652
  %v684 = vpack.c.b16 %v655, %v654
  %v685 = vpack.c.b16 %v657, %v656
  %v686 = vpack.c.b16 %v659, %v658
  %v687 = vpack.c.b16 %v661, %v660
  %v688 = vpack.c.b16 %v663, %v662
  %v689 = vpack.c.b16 %v664, %v664
  %v691 = vsel %vm202, %v665, 0
  %v694 = vsel %vm202, %v666, 0
  %v697 = vsel %vm202, %v667, 0
  %v700 = vsel %vm202, %v668, 0
  %v703 = vsel %vm202, %v669, 0
  %v706 = vsel %vm202, %v670, 0
  %v709 = vsel %vm202, %v671, 0
  %v712 = vsel %vm202, %v672, 0
  %v715 = vsel %vm202, %v673, 0
  %v718 = vsel %vm202, %v674, 0
  %v721 = vsel %vm202, %v675, 0
  %v724 = vsel %vm202, %v676, 0
  %v727 = vsel %vm202, %v677, 0
  %v730 = vsel %vm202, %v678, 0
  %v733 = vsel %vm202, %v679, 0
  %v736 = vsel %vm202, %v680, 0
  %v739 = vsel %vm202, %v681, 0
  %v742 = vsel %vm202, %v682, 0
  %v745 = vsel %vm202, %v683, 0
  %v748 = vsel %vm202, %v684, 0
  %v751 = vsel %vm202, %v685, 0
  %v754 = vsel %vm202, %v686, 0
  %v757 = vsel %vm202, %v687, 0
  %v760 = vsel %vm202, %v688, 0
  %v763 = vsel %vm202, %v689, 0
  %765 = vmatprep.subr.bf16.mxu0 0
  %766 = vmatpush1.bf16.msra.mxu0 %v199
  %767 = vmatprep.subr.bf16.mxu0 0
  %768 = vmatpush1.bf16.msra.mxu0 %v283
  %769 = vmatprep.subr.bf16.mxu0 0
  %770 = vmatpush1.bf16.msra.mxu0 0
  %771 = vmatprep.subr.bf16.mxu0 0
  %772 = vmatpush1.bf16.msra.mxu0 0
  %773 = vmatprep.subr.bf16.mxu0 0
  %774 = vmatpush1.bf16.msra.mxu0 0
  %775 = vmatprep.subr.bf16.mxu0 0
  %776 = vmatpush1.bf16.msra.mxu0 0
  %777 = vmatprep.subr.bf16.mxu0 0
  %778 = vmatpush1.bf16.msra.mxu0 0
  %779 = vmatprep.subr.bf16.mxu0 0
  %780 = vmatpush1.bf16.msra.mxu0 0
  %781 = vmatprep.subr.bf16.mxu0 0
  %782 = vmatpush1.bf16.msra.mxu0 0
  %783 = vmatprep.subr.bf16.mxu0 0
  %784 = vmatpush1.bf16.msra.mxu0 0
  %785 = vmatprep.subr.bf16.mxu0 0
  %786 = vmatpush1.bf16.msra.mxu0 0
  %787 = vmatprep.subr.bf16.mxu0 0
  %788 = vmatpush1.bf16.msra.mxu0 0
  %789 = vmatprep.subr.bf16.mxu0 0
  %790 = vmatpush1.bf16.msra.mxu0 0
  %791 = vmatprep.subr.bf16.mxu0 0
  %792 = vmatpush1.bf16.msra.mxu0 0
  %793 = vmatprep.subr.bf16.mxu0 0
  %794 = vmatpush1.bf16.msra.mxu0 0
  %795 = vmatprep.subr.bf16.mxu0 0
  %796 = vmatpush1.bf16.msra.mxu0 0
  %797 = vmatprep.mubr.bf16.mxu0 0
  %798 = vmatmul.mubr.bf16.gmra.mrb[0].mxu0 %v691
  %v799 = vpop.f32.mrb[0].mxu0
  %v800 = vadd.f32 0.0, %v799
  %v801 = vpop.f32.mrb[0].mxu0
  %v802 = vpop.f32.mrb[0].mxu0
  %v803 = vadd.f32 0.0, %v802
  %v804 = vpop.f32.mrb[0].mxu0
  %805 = vmatprep.mubr.bf16.mxu0 0
  %806 = vmatmul.mubr.bf16.gmra.mrb[0].mxu0 %v694
  %v807 = vpop.f32.mrb[0].mxu0
  %v808 = vadd.f32 0.0, %v807
  %v809 = vpop.f32.mrb[0].mxu0
  %v810 = vpop.f32.mrb[0].mxu0
  %v811 = vadd.f32 0.0, %v810
  %v812 = vpop.f32.mrb[0].mxu0
  %813 = vmatprep.mubr.bf16.mxu0 0
  %814 = vmatmul.mubr.bf16.gmra.mrb[0].mxu0 %v697
  %v815 = vpop.f32.mrb[0].mxu0
  %v816 = vadd.f32 0.0, %v815
  %v817 = vpop.f32.mrb[0].mxu0
  %v818 = vpop.f32.mrb[0].mxu0
  %v819 = vadd.f32 0.0, %v818
  %v820 = vpop.f32.mrb[0].mxu0
  %821 = vmatprep.mubr.bf16.mxu0 0
  %822 = vmatmul.mubr.bf16.gmra.mrb[0].mxu0 %v700
  %v823 = vpop.f32.mrb[0].mxu0
  %v824 = vadd.f32 0.0, %v823
  %v825 = vpop.f32.mrb[0].mxu0
  %v826 = vpop.f32.mrb[0].mxu0
  %v827 = vadd.f32 0.0, %v826
  %v828 = vpop.f32.mrb[0].mxu0
  %829 = vmatprep.mubr.bf16.mxu0 0
  %830 = vmatmul.mubr.bf16.gmra.mrb[0].mxu0 %v703
  %v831 = vpop.f32.mrb[0].mxu0
  %v832 = vadd.f32 0.0, %v831
  %v833 = vpop.f32.mrb[0].mxu0
  %v834 = vpop.f32.mrb[0].mxu0
  %v835 = vadd.f32 0.0, %v834
  %v836 = vpop.f32.mrb[0].mxu0
  %837 = vmatprep.mubr.bf16.mxu0 0
  %838 = vmatmul.mubr.bf16.gmra.mrb[0].mxu0 %v706
  %v839 = vpop.f32.mrb[0].mxu0
  %v840 = vadd.f32 0.0, %v839
  %v841 = vpop.f32.mrb[0].mxu0
  %v842 = vpop.f32.mrb[0].mxu0
  %v843 = vadd.f32 0.0, %v842
  %v844 = vpop.f32.mrb[0].mxu0
  %845 = vmatprep.mubr.bf16.mxu0 0
  %846 = vmatmul.mubr.bf16.gmra.mrb[0].mxu0 %v709
  %v847 = vpop.f32.mrb[0].mxu0
  %v848 = vadd.f32 0.0, %v847
  %v849 = vpop.f32.mrb[0].mxu0
  %v850 = vpop.f32.mrb[0].mxu0
  %v851 = vadd.f32 0.0, %v850
  %v852 = vpop.f32.mrb[0].mxu0
  %853 = vmatprep.mubr.bf16.mxu0 0
  %854 = vmatmul.mubr.bf16.gmra.mrb[0].mxu0 %v712
  %v855 = vpop.f32.mrb[0].mxu0
  %v856 = vadd.f32 0.0, %v855
  %v857 = vpop.f32.mrb[0].mxu0
  %v858 = vpop.f32.mrb[0].mxu0
  %v859 = vadd.f32 0.0, %v858
  %v860 = vpop.f32.mrb[0].mxu0
  %861 = vmatprep.mubr.bf16.mxu0 0
  %862 = vmatmul.mubr.bf16.gmra.mrb[0].mxu0 %v715
  %v863 = vpop.f32.mrb[0].mxu0
  %v864 = vadd.f32 0.0, %v863
  %v865 = vpop.f32.mrb[0].mxu0
  %v866 = vpop.f32.mrb[0].mxu0
  %v867 = vadd.f32 0.0, %v866
  %v868 = vpop.f32.mrb[0].mxu0
  %869 = vmatprep.mubr.bf16.mxu0 0
  %870 = vmatmul.mubr.bf16.gmra.mrb[0].mxu0 %v718
  %v871 = vpop.f32.mrb[0].mxu0
  %v872 = vadd.f32 0.0, %v871
  %v873 = vpop.f32.mrb[0].mxu0
  %v874 = vpop.f32.mrb[0].mxu0
  %v875 = vadd.f32 0.0, %v874
  %v876 = vpop.f32.mrb[0].mxu0
  %877 = vmatprep.mubr.bf16.mxu0 0
  %878 = vmatmul.mubr.bf16.gmra.mrb[0].mxu0 %v721
  %v879 = vpop.f32.mrb[0].mxu0
  %v880 = vadd.f32 0.0, %v879
  %v881 = vpop.f32.mrb[0].mxu0
  %v882 = vpop.f32.mrb[0].mxu0
  %v883 = vadd.f32 0.0, %v882
  %v884 = vpop.f32.mrb[0].mxu0
  %885 = vmatprep.mubr.bf16.mxu0 0
  %886 = vmatmul.mubr.bf16.gmra.mrb[0].mxu0 %v724
  %v887 = vpop.f32.mrb[0].mxu0
  %v888 = vadd.f32 0.0, %v887
  %v889 = vpop.f32.mrb[0].mxu0
  %v890 = vpop.f32.mrb[0].mxu0
  %v891 = vadd.f32 0.0, %v890
  %v892 = vpop.f32.mrb[0].mxu0
  %893 = vmatprep.mubr.bf16.mxu0 0
  %894 = vmatmul.mubr.bf16.gmra.mrb[0].mxu0 %v727
  %v895 = vpop.f32.mrb[0].mxu0
  %v896 = vadd.f32 0.0, %v895
  %v897 = vpop.f32.mrb[0].mxu0
  %v898 = vpop.f32.mrb[0].mxu0
  %v899 = vadd.f32 0.0, %v898
  %v900 = vpop.f32.mrb[0].mxu0
  %901 = vmatprep.mubr.bf16.mxu0 0
  %902 = vmatmul.mubr.bf16.gmra.mrb[0].mxu0 %v730
  %v903 = vpop.f32.mrb[0].mxu0
  %v904 = vadd.f32 0.0, %v903
  %v905 = vpop.f32.mrb[0].mxu0
  %v906 = vpop.f32.mrb[0].mxu0
  %v907 = vadd.f32 0.0, %v906
  %v908 = vpop.f32.mrb[0].mxu0
  %909 = vmatprep.mubr.bf16.mxu0 0
  %910 = vmatmul.mubr.bf16.gmra.mrb[0].mxu0 %v733
  %v911 = vpop.f32.mrb[0].mxu0
  %v912 = vadd.f32 0.0, %v911
  %v913 = vpop.f32.mrb[0].mxu0
  %v914 = vpop.f32.mrb[0].mxu0
  %v915 = vadd.f32 0.0, %v914
  %v916 = vpop.f32.mrb[0].mxu0
  %917 = vmatprep.mubr.bf16.mxu0 0
  %918 = vmatmul.mubr.bf16.gmra.mrb[0].mxu0 %v736
  %v919 = vpop.f32.mrb[0].mxu0
  %v920 = vadd.f32 0.0, %v919
  %v921 = vpop.f32.mrb[0].mxu0
  %v922 = vpop.f32.mrb[0].mxu0
  %v923 = vadd.f32 0.0, %v922
  %v924 = vpop.f32.mrb[0].mxu0
  %925 = vmatprep.mubr.bf16.mxu0 0
  %926 = vmatmul.mubr.bf16.gmra.mrb[0].mxu0 %v739
  %v927 = vpop.f32.mrb[0].mxu0
  %v928 = vadd.f32 0.0, %v927
  %v929 = vpop.f32.mrb[0].mxu0
  %v930 = vpop.f32.mrb[0].mxu0
  %v931 = vadd.f32 0.0, %v930
  %v932 = vpop.f32.mrb[0].mxu0
  %933 = vmatprep.mubr.bf16.mxu0 0
  %934 = vmatmul.mubr.bf16.gmra.mrb[0].mxu0 %v742
  %v935 = vpop.f32.mrb[0].mxu0
  %v936 = vadd.f32 0.0, %v935
  %v937 = vpop.f32.mrb[0].mxu0
  %v938 = vpop.f32.mrb[0].mxu0
  %v939 = vadd.f32 0.0, %v938
  %v940 = vpop.f32.mrb[0].mxu0
  %941 = vmatprep.mubr.bf16.mxu0 0
  %942 = vmatmul.mubr.bf16.gmra.mrb[0].mxu0 %v745
  %v943 = vpop.f32.mrb[0].mxu0
  %v944 = vadd.f32 0.0, %v943
  %v945 = vpop.f32.mrb[0].mxu0
  %v946 = vpop.f32.mrb[0].mxu0
  %v947 = vadd.f32 0.0, %v946
  %v948 = vpop.f32.mrb[0].mxu0
  %949 = vmatprep.mubr.bf16.mxu0 0
  %950 = vmatmul.mubr.bf16.gmra.mrb[0].mxu0 %v748
  %v951 = vpop.f32.mrb[0].mxu0
  %v952 = vadd.f32 0.0, %v951
  %v953 = vpop.f32.mrb[0].mxu0
  %v954 = vpop.f32.mrb[0].mxu0
  %v955 = vadd.f32 0.0, %v954
  %v956 = vpop.f32.mrb[0].mxu0
  %957 = vmatprep.mubr.bf16.mxu0 0
  %958 = vmatmul.mubr.bf16.gmra.mrb[0].mxu0 %v751
  %v959 = vpop.f32.mrb[0].mxu0
  %v960 = vadd.f32 0.0, %v959
  %v961 = vpop.f32.mrb[0].mxu0
  %v962 = vpop.f32.mrb[0].mxu0
  %v963 = vadd.f32 0.0, %v962
  %v964 = vpop.f32.mrb[0].mxu0
  %965 = vmatprep.mubr.bf16.mxu0 0
  %966 = vmatmul.mubr.bf16.gmra.mrb[0].mxu0 %v754
  %v967 = vpop.f32.mrb[0].mxu0
  %v968 = vadd.f32 0.0, %v967
  %v969 = vpop.f32.mrb[0].mxu0
  %v970 = vpop.f32.mrb[0].mxu0
  %v971 = vadd.f32 0.0, %v970
  %v972 = vpop.f32.mrb[0].mxu0
  %973 = vmatprep.mubr.bf16.mxu0 0
  %974 = vmatmul.mubr.bf16.gmra.mrb[0].mxu0 %v757
  %v975 = vpop.f32.mrb[0].mxu0
  %v976 = vadd.f32 0.0, %v975
  %v977 = vpop.f32.mrb[0].mxu0
  %v978 = vpop.f32.mrb[0].mxu0
  %v979 = vadd.f32 0.0, %v978
  %v980 = vpop.f32.mrb[0].mxu0
  %981 = vmatprep.mubr.bf16.mxu0 0
  %982 = vmatmul.mubr.bf16.gmra.mrb[0].mxu0 %v760
  %v983 = vpop.f32.mrb[0].mxu0
  %v984 = vadd.f32 0.0, %v983
  %v985 = vpop.f32.mrb[0].mxu0
  %v986 = vpop.f32.mrb[0].mxu0
  %v987 = vadd.f32 0.0, %v986
  %v988 = vpop.f32.mrb[0].mxu0
  %989 = vmatprep.mubr.bf16.mxu0 0
  %990 = vmatmul.mubr.bf16.gmra.mrb[0].mxu0 %v763
  %v991 = vpop.f32.mrb[0].mxu0
  %v992 = vadd.f32 0.0, %v991
  %v993 = vpop.f32.mrb[0].mxu0
  %v994 = vpop.f32.mrb[0].mxu0
  %v995 = vpop.f32.mrb[0].mxu0
  %996 = vdwg.mxu0
  %s997 = scalar_lea.vmem %s0, 392
  %v998 = vld [vmem:[%s997] sm:$0xf]
  %v999 = vld [vmem:[%s997 + $0x4] sm:$0xf]
  %v1000 = vld [vmem:[%s997 + $0x8] sm:$0xf]
  %v1001 = vld [vmem:[%s997 + $0xc] sm:$0xf]
  %v1002 = vld [vmem:[%s997 + $0x10] sm:$0xf]
  %v1003 = vld [vmem:[%s997 + $0x14] sm:$0xf]
  %v1004 = vld [vmem:[%s997 + $0x18] sm:$0xf]
  %v1005 = vld [vmem:[%s997 + $0x1c] sm:$0xf]
  %v1006 = vld [vmem:[%s997 + $0x20] sm:$0xf]
  %v1007 = vld [vmem:[%s997 + $0x24] sm:$0xf]
  %v1008 = vld [vmem:[%s997 + $0x28] sm:$0xf]
  %v1009 = vld [vmem:[%s997 + $0x2c] sm:$0xf]
  %v1010 = vld [vmem:[%s997 + $0x30] sm:$0xf]
  %v1011 = vld [vmem:[%s997 + $0x34] sm:$0xf]
  %v1012 = vld [vmem:[%s997 + $0x38] sm:$0xf]
  %v1013 = vld [vmem:[%s997 + $0x3c] sm:$0xf]
  %v1014 = vld [vmem:[%s997 + $0x40] sm:$0xf]
  %v1015 = vld [vmem:[%s997 + $0x44] sm:$0xf]
  %v1016 = vld [vmem:[%s997 + $0x48] sm:$0xf]
  %v1017 = vld [vmem:[%s997 + $0x4c] sm:$0xf]
  %v1018 = vld [vmem:[%s997 + $0x50] sm:$0xf]
  %v1019 = vld [vmem:[%s997 + $0x54] sm:$0xf]
  %v1020 = vld [vmem:[%s997 + $0x58] sm:$0xf]
  %v1021 = vld [vmem:[%s997 + $0x5c] sm:$0xf]
  %v1022 = vld [vmem:[%s997 + $0x60] sm:$0xf]
  %v1023 = vld [vmem:[%s997 + $0x64] sm:$0xf]
  %v1024 = vld [vmem:[%s997 + $0x68] sm:$0xf]
  %v1025 = vld [vmem:[%s997 + $0x6c] sm:$0xf]
  %v1026 = vld [vmem:[%s997 + $0x70] sm:$0xf]
  %v1027 = vld [vmem:[%s997 + $0x74] sm:$0xf]
  %v1028 = vld [vmem:[%s997 + $0x78] sm:$0xf]
  %v1029 = vld [vmem:[%s997 + $0x7c] sm:$0xf]
  %v1030 = vld [vmem:[%s997 + $0x80] sm:$0xf]
  %v1031 = vld [vmem:[%s997 + $0x84] sm:$0xf]
  %v1032 = vld [vmem:[%s997 + $0x88] sm:$0xf]
  %v1033 = vld [vmem:[%s997 + $0x8c] sm:$0xf]
  %v1034 = vld [vmem:[%s997 + $0x90] sm:$0xf]
  %v1035 = vld [vmem:[%s997 + $0x94] sm:$0xf]
  %v1036 = vld [vmem:[%s997 + $0x98] sm:$0xf]
  %v1037 = vld [vmem:[%s997 + $0x9c] sm:$0xf]
  %v1038 = vld [vmem:[%s997 + $0xa0] sm:$0xf]
  %v1039 = vld [vmem:[%s997 + $0xa4] sm:$0xf]
  %v1040 = vld [vmem:[%s997 + $0xa8] sm:$0xf]
  %v1041 = vld [vmem:[%s997 + $0xac] sm:$0xf]
  %v1042 = vld [vmem:[%s997 + $0xb0] sm:$0xf]
  %v1043 = vld [vmem:[%s997 + $0xb4] sm:$0xf]
  %v1044 = vld [vmem:[%s997 + $0xb8] sm:$0xf]
  %v1045 = vld [vmem:[%s997 + $0xbc] sm:$0xf]
  %v1046 = vld [vmem:[%s997 + $0xc0] sm:$0xf]
  %v1096 = vunpack.c.l.b16 %v998
  %v1097 = vunpack.c.l.b16 %v999
  %v1098 = vunpack.c.l.b16 %v1000
  %v1099 = vunpack.c.l.b16 %v1001
  %v1100 = vunpack.c.l.b16 %v1002
  %v1101 = vunpack.c.l.b16 %v1003
  %v1102 = vunpack.c.l.b16 %v1004
  %v1103 = vunpack.c.l.b16 %v1005
  %v1104 = vunpack.c.l.b16 %v1006
  %v1105 = vunpack.c.l.b16 %v1007
  %v1106 = vunpack.c.l.b16 %v1008
  %v1107 = vunpack.c.l.b16 %v1009
  %v1108 = vunpack.c.l.b16 %v1010
  %v1109 = vunpack.c.l.b16 %v1011
  %v1110 = vunpack.c.l.b16 %v1012
  %v1111 = vunpack.c.l.b16 %v1013
  %v1112 = vunpack.c.l.b16 %v1014
  %v1113 = vunpack.c.l.b16 %v1015
  %v1114 = vunpack.c.l.b16 %v1016
  %v1115 = vunpack.c.l.b16 %v1017
  %v1116 = vunpack.c.l.b16 %v1018
  %v1117 = vunpack.c.l.b16 %v1019
  %v1118 = vunpack.c.l.b16 %v1020
  %v1119 = vunpack.c.l.b16 %v1021
  %v1120 = vunpack.c.l.b16 %v1022
  %v1121 = vunpack.c.l.b16 %v1023
  %v1122 = vunpack.c.l.b16 %v1024
  %v1123 = vunpack.c.l.b16 %v1025
  %v1124 = vunpack.c.l.b16 %v1026
  %v1125 = vunpack.c.l.b16 %v1027
  %v1126 = vunpack.c.l.b16 %v1028
  %v1127 = vunpack.c.l.b16 %v1029
  %v1128 = vunpack.c.l.b16 %v1030
  %v1129 = vunpack.c.l.b16 %v1031
  %v1130 = vunpack.c.l.b16 %v1032
  %v1131 = vunpack.c.l.b16 %v1033
  %v1132 = vunpack.c.l.b16 %v1034
  %v1133 = vunpack.c.l.b16 %v1035
  %v1134 = vunpack.c.l.b16 %v1036
  %v1135 = vunpack.c.l.b16 %v1037
  %v1136 = vunpack.c.l.b16 %v1038
  %v1137 = vunpack.c.l.b16 %v1039
  %v1138 = vunpack.c.l.b16 %v1040
  %v1139 = vunpack.c.l.b16 %v1041
  %v1140 = vunpack.c.l.b16 %v1042
  %v1141 = vunpack.c.l.b16 %v1043
  %v1142 = vunpack.c.l.b16 %v1044
  %v1143 = vunpack.c.l.b16 %v1045
  %v1144 = vunpack.c.l.b16 %v1046
  %v1145 = vpack.c.b16 %v1097, %v1096
  %v1146 = vpack.c.b16 %v1099, %v1098
  %v1147 = vpack.c.b16 %v1101, %v1100
  %v1148 = vpack.c.b16 %v1103, %v1102
  %v1149 = vpack.c.b16 %v1105, %v1104
  %v1150 = vpack.c.b16 %v1107, %v1106
  %v1151 = vpack.c.b16 %v1109, %v1108
  %v1152 = vpack.c.b16 %v1111, %v1110
  %v1153 = vpack.c.b16 %v1113, %v1112
  %v1154 = vpack.c.b16 %v1115, %v1114
  %v1155 = vpack.c.b16 %v1117, %v1116
  %v1156 = vpack.c.b16 %v1119, %v1118
  %v1157 = vpack.c.b16 %v1121, %v1120
  %v1158 = vpack.c.b16 %v1123, %v1122
  %v1159 = vpack.c.b16 %v1125, %v1124
  %v1160 = vpack.c.b16 %v1127, %v1126
  %v1161 = vpack.c.b16 %v1129, %v1128
  %v1162 = vpack.c.b16 %v1131, %v1130
  %v1163 = vpack.c.b16 %v1133, %v1132
  %v1164 = vpack.c.b16 %v1135, %v1134
  %v1165 = vpack.c.b16 %v1137, %v1136
  %v1166 = vpack.c.b16 %v1139, %v1138
  %v1167 = vpack.c.b16 %v1141, %v1140
  %v1168 = vpack.c.b16 %v1143, %v1142
  %v1169 = vpack.c.b16 %v1144, %v1144
  %v1171 = vsel %vm202, %v1145, 0
  %v1174 = vsel %vm202, %v1146, 0
  %v1177 = vsel %vm202, %v1147, 0
  %v1180 = vsel %vm202, %v1148, 0
  %v1183 = vsel %vm202, %v1149, 0
  %v1186 = vsel %vm202, %v1150, 0
  %v1189 = vsel %vm202, %v1151, 0
  %v1192 = vsel %vm202, %v1152, 0
  %v1195 = vsel %vm202, %v1153, 0
  %v1198 = vsel %vm202, %v1154, 0
  %v1201 = vsel %vm202, %v1155, 0
  %v1204 = vsel %vm202, %v1156, 0
  %v1207 = vsel %vm202, %v1157, 0
  %v1210 = vsel %vm202, %v1158, 0
  %v1213 = vsel %vm202, %v1159, 0
  %v1216 = vsel %vm202, %v1160, 0
  %v1219 = vsel %vm202, %v1161, 0
  %v1222 = vsel %vm202, %v1162, 0
  %v1225 = vsel %vm202, %v1163, 0
  %v1228 = vsel %vm202, %v1164, 0
  %v1231 = vsel %vm202, %v1165, 0
  %v1234 = vsel %vm202, %v1166, 0
  %v1237 = vsel %vm202, %v1167, 0
  %v1240 = vsel %vm202, %v1168, 0
  %v1243 = vsel %vm202, %v1169, 0
  %1245 = vmatprep.subr.bf16.mxu0 0
  %1246 = vmatpush1.bf16.msra.mxu0 %v199
  %1247 = vmatprep.subr.bf16.mxu0 0
  %1248 = vmatpush1.bf16.msra.mxu0 %v283
  %1249 = vmatprep.subr.bf16.mxu0 0
  %1250 = vmatpush1.bf16.msra.mxu0 0
  %1251 = vmatprep.subr.bf16.mxu0 0
  %1252 = vmatpush1.bf16.msra.mxu0 0
  %1253 = vmatprep.subr.bf16.mxu0 0
  %1254 = vmatpush1.bf16.msra.mxu0 0
  %1255 = vmatprep.subr.bf16.mxu0 0
  %1256 = vmatpush1.bf16.msra.mxu0 0
  %1257 = vmatprep.subr.bf16.mxu0 0
  %1258 = vmatpush1.bf16.msra.mxu0 0
  %1259 = vmatprep.subr.bf16.mxu0 0
  %1260 = vmatpush1.bf16.msra.mxu0 0
  %1261 = vmatprep.subr.bf16.mxu0 0
  %1262 = vmatpush1.bf16.msra.mxu0 0
  %1263 = vmatprep.subr.bf16.mxu0 0
  %1264 = vmatpush1.bf16.msra.mxu0 0
  %1265 = vmatprep.subr.bf16.mxu0 0
  %1266 = vmatpush1.bf16.msra.mxu0 0
  %1267 = vmatprep.subr.bf16.mxu0 0
  %1268 = vmatpush1.bf16.msra.mxu0 0
  %1269 = vmatprep.subr.bf16.mxu0 0
  %1270 = vmatpush1.bf16.msra.mxu0 0
  %1271 = vmatprep.subr.bf16.mxu0 0
  %1272 = vmatpush1.bf16.msra.mxu0 0
  %1273 = vmatprep.subr.bf16.mxu0 0
  %1274 = vmatpush1.bf16.msra.mxu0 0
  %1275 = vmatprep.subr.bf16.mxu0 0
  %1276 = vmatpush1.bf16.msra.mxu0 0
  %1277 = vmatprep.mubr.bf16.mxu0 0
  %1278 = vmatmul.mubr.bf16.gmra.mrb[0].mxu0 %v1171
  %v1279 = vpop.f32.mrb[0].mxu0
  %v1280 = vadd.f32 0.0, %v1279
  %v1281 = vpop.f32.mrb[0].mxu0
  %v1282 = vpop.f32.mrb[0].mxu0
  %v1283 = vadd.f32 0.0, %v1282
  %v1284 = vpop.f32.mrb[0].mxu0
  %1285 = vmatprep.mubr.bf16.mxu0 0
  %1286 = vmatmul.mubr.bf16.gmra.mrb[0].mxu0 %v1174
  %v1287 = vpop.f32.mrb[0].mxu0
  %v1288 = vadd.f32 0.0, %v1287
  %v1289 = vpop.f32.mrb[0].mxu0
  %v1290 = vpop.f32.mrb[0].mxu0
  %v1291 = vadd.f32 0.0, %v1290
  %v1292 = vpop.f32.mrb[0].mxu0
  %1293 = vmatprep.mubr.bf16.mxu0 0
  %1294 = vmatmul.mubr.bf16.gmra.mrb[0].mxu0 %v1177
  %v1295 = vpop.f32.mrb[0].mxu0
  %v1296 = vadd.f32 0.0, %v1295
  %v1297 = vpop.f32.mrb[0].mxu0
  %v1298 = vpop.f32.mrb[0].mxu0
  %v1299 = vadd.f32 0.0, %v1298
  %v1300 = vpop.f32.mrb[0].mxu0
  %1301 = vmatprep.mubr.bf16.mxu0 0
  %1302 = vmatmul.mubr.bf16.gmra.mrb[0].mxu0 %v1180
  %v1303 = vpop.f32.mrb[0].mxu0
  %v1304 = vadd.f32 0.0, %v1303
  %v1305 = vpop.f32.mrb[0].mxu0
  %v1306 = vpop.f32.mrb[0].mxu0
  %v1307 = vadd.f32 0.0, %v1306
  %v1308 = vpop.f32.mrb[0].mxu0
  %1309 = vmatprep.mubr.bf16.mxu0 0
  %1310 = vmatmul.mubr.bf16.gmra.mrb[0].mxu0 %v1183
  %v1311 = vpop.f32.mrb[0].mxu0
  %v1312 = vadd.f32 0.0, %v1311
  %v1313 = vpop.f32.mrb[0].mxu0
  %v1314 = vpop.f32.mrb[0].mxu0
  %v1315 = vadd.f32 0.0, %v1314
  %v1316 = vpop.f32.mrb[0].mxu0
  %1317 = vmatprep.mubr.bf16.mxu0 0
  %1318 = vmatmul.mubr.bf16.gmra.mrb[0].mxu0 %v1186
  %v1319 = vpop.f32.mrb[0].mxu0
  %v1320 = vadd.f32 0.0, %v1319
  %v1321 = vpop.f32.mrb[0].mxu0
  %v1322 = vpop.f32.mrb[0].mxu0
  %v1323 = vadd.f32 0.0, %v1322
  %v1324 = vpop.f32.mrb[0].mxu0
  %1325 = vmatprep.mubr.bf16.mxu0 0
  %1326 = vmatmul.mubr.bf16.gmra.mrb[0].mxu0 %v1189
  %v1327 = vpop.f32.mrb[0].mxu0
  %v1328 = vadd.f32 0.0, %v1327
  %v1329 = vpop.f32.mrb[0].mxu0
  %v1330 = vpop.f32.mrb[0].mxu0
  %v1331 = vadd.f32 0.0, %v1330
  %v1332 = vpop.f32.mrb[0].mxu0
  %1333 = vmatprep.mubr.bf16.mxu0 0
  %1334 = vmatmul.mubr.bf16.gmra.mrb[0].mxu0 %v1192
  %v1335 = vpop.f32.mrb[0].mxu0
  %v1336 = vadd.f32 0.0, %v1335
  %v1337 = vpop.f32.mrb[0].mxu0
  %v1338 = vpop.f32.mrb[0].mxu0
  %v1339 = vadd.f32 0.0, %v1338
  %v1340 = vpop.f32.mrb[0].mxu0
  %1341 = vmatprep.mubr.bf16.mxu0 0
  %1342 = vmatmul.mubr.bf16.gmra.mrb[0].mxu0 %v1195
  %v1343 = vpop.f32.mrb[0].mxu0
  %v1344 = vadd.f32 0.0, %v1343
  %v1345 = vpop.f32.mrb[0].mxu0
  %v1346 = vpop.f32.mrb[0].mxu0
  %v1347 = vadd.f32 0.0, %v1346
  %v1348 = vpop.f32.mrb[0].mxu0
  %1349 = vmatprep.mubr.bf16.mxu0 0
  %1350 = vmatmul.mubr.bf16.gmra.mrb[0].mxu0 %v1198
  %v1351 = vpop.f32.mrb[0].mxu0
  %v1352 = vadd.f32 0.0, %v1351
  %v1353 = vpop.f32.mrb[0].mxu0
  %v1354 = vpop.f32.mrb[0].mxu0
  %v1355 = vadd.f32 0.0, %v1354
  %v1356 = vpop.f32.mrb[0].mxu0
  %1357 = vmatprep.mubr.bf16.mxu0 0
  %1358 = vmatmul.mubr.bf16.gmra.mrb[0].mxu0 %v1201
  %v1359 = vpop.f32.mrb[0].mxu0
  %v1360 = vadd.f32 0.0, %v1359
  %v1361 = vpop.f32.mrb[0].mxu0
  %v1362 = vpop.f32.mrb[0].mxu0
  %v1363 = vadd.f32 0.0, %v1362
  %v1364 = vpop.f32.mrb[0].mxu0
  %1365 = vmatprep.mubr.bf16.mxu0 0
  %1366 = vmatmul.mubr.bf16.gmra.mrb[0].mxu0 %v1204
  %v1367 = vpop.f32.mrb[0].mxu0
  %v1368 = vadd.f32 0.0, %v1367
  %v1369 = vpop.f32.mrb[0].mxu0
  %v1370 = vpop.f32.mrb[0].mxu0
  %v1371 = vadd.f32 0.0, %v1370
  %v1372 = vpop.f32.mrb[0].mxu0
  %1373 = vmatprep.mubr.bf16.mxu0 0
  %1374 = vmatmul.mubr.bf16.gmra.mrb[0].mxu0 %v1207
  %v1375 = vpop.f32.mrb[0].mxu0
  %v1376 = vadd.f32 0.0, %v1375
  %v1377 = vpop.f32.mrb[0].mxu0
  %v1378 = vpop.f32.mrb[0].mxu0
  %v1379 = vadd.f32 0.0, %v1378
  %v1380 = vpop.f32.mrb[0].mxu0
  %1381 = vmatprep.mubr.bf16.mxu0 0
  %1382 = vmatmul.mubr.bf16.gmra.mrb[0].mxu0 %v1210
  %v1383 = vpop.f32.mrb[0].mxu0
  %v1384 = vadd.f32 0.0, %v1383
  %v1385 = vpop.f32.mrb[0].mxu0
  %v1386 = vpop.f32.mrb[0].mxu0
  %v1387 = vadd.f32 0.0, %v1386
  %v1388 = vpop.f32.mrb[0].mxu0
  %1389 = vmatprep.mubr.bf16.mxu0 0
  %1390 = vmatmul.mubr.bf16.gmra.mrb[0].mxu0 %v1213
  %v1391 = vpop.f32.mrb[0].mxu0
  %v1392 = vadd.f32 0.0, %v1391
  %v1393 = vpop.f32.mrb[0].mxu0
  %v1394 = vpop.f32.mrb[0].mxu0
  %v1395 = vadd.f32 0.0, %v1394
  %v1396 = vpop.f32.mrb[0].mxu0
  %1397 = vmatprep.mubr.bf16.mxu0 0
  %1398 = vmatmul.mubr.bf16.gmra.mrb[0].mxu0 %v1216
  %v1399 = vpop.f32.mrb[0].mxu0
  %v1400 = vadd.f32 0.0, %v1399
  %v1401 = vpop.f32.mrb[0].mxu0
  %v1402 = vpop.f32.mrb[0].mxu0
  %v1403 = vadd.f32 0.0, %v1402
  %v1404 = vpop.f32.mrb[0].mxu0
  %1405 = vmatprep.mubr.bf16.mxu0 0
  %1406 = vmatmul.mubr.bf16.gmra.mrb[0].mxu0 %v1219
  %v1407 = vpop.f32.mrb[0].mxu0
  %v1408 = vadd.f32 0.0, %v1407
  %v1409 = vpop.f32.mrb[0].mxu0
  %v1410 = vpop.f32.mrb[0].mxu0
  %v1411 = vadd.f32 0.0, %v1410
  %v1412 = vpop.f32.mrb[0].mxu0
  %1413 = vmatprep.mubr.bf16.mxu0 0
  %1414 = vmatmul.mubr.bf16.gmra.mrb[0].mxu0 %v1222
  %v1415 = vpop.f32.mrb[0].mxu0
  %v1416 = vadd.f32 0.0, %v1415
  %v1417 = vpop.f32.mrb[0].mxu0
  %v1418 = vpop.f32.mrb[0].mxu0
  %v1419 = vadd.f32 0.0, %v1418
  %v1420 = vpop.f32.mrb[0].mxu0
  %1421 = vmatprep.mubr.bf16.mxu0 0
  %1422 = vmatmul.mubr.bf16.gmra.mrb[0].mxu0 %v1225
  %v1423 = vpop.f32.mrb[0].mxu0
  %v1424 = vadd.f32 0.0, %v1423
  %v1425 = vpop.f32.mrb[0].mxu0
  %v1426 = vpop.f32.mrb[0].mxu0
  %v1427 = vadd.f32 0.0, %v1426
  %v1428 = vpop.f32.mrb[0].mxu0
  %1429 = vmatprep.mubr.bf16.mxu0 0
  %1430 = vmatmul.mubr.bf16.gmra.mrb[0].mxu0 %v1228
  %v1431 = vpop.f32.mrb[0].mxu0
  %v1432 = vadd.f32 0.0, %v1431
  %v1433 = vpop.f32.mrb[0].mxu0
  %v1434 = vpop.f32.mrb[0].mxu0
  %v1435 = vadd.f32 0.0, %v1434
  %v1436 = vpop.f32.mrb[0].mxu0
  %1437 = vmatprep.mubr.bf16.mxu0 0
  %1438 = vmatmul.mubr.bf16.gmra.mrb[0].mxu0 %v1231
  %v1439 = vpop.f32.mrb[0].mxu0
  %v1440 = vadd.f32 0.0, %v1439
  %v1441 = vpop.f32.mrb[0].mxu0
  %v1442 = vpop.f32.mrb[0].mxu0
  %v1443 = vadd.f32 0.0, %v1442
  %v1444 = vpop.f32.mrb[0].mxu0
  %1445 = vmatprep.mubr.bf16.mxu0 0
  %1446 = vmatmul.mubr.bf16.gmra.mrb[0].mxu0 %v1234
  %v1447 = vpop.f32.mrb[0].mxu0
  %v1448 = vadd.f32 0.0, %v1447
  %v1449 = vpop.f32.mrb[0].mxu0
  %v1450 = vpop.f32.mrb[0].mxu0
  %v1451 = vadd.f32 0.0, %v1450
  %v1452 = vpop.f32.mrb[0].mxu0
  %1453 = vmatprep.mubr.bf16.mxu0 0
  %1454 = vmatmul.mubr.bf16.gmra.mrb[0].mxu0 %v1237
  %v1455 = vpop.f32.mrb[0].mxu0
  %v1456 = vadd.f32 0.0, %v1455
  %v1457 = vpop.f32.mrb[0].mxu0
  %v1458 = vpop.f32.mrb[0].mxu0
  %v1459 = vadd.f32 0.0, %v1458
  %v1460 = vpop.f32.mrb[0].mxu0
  %1461 = vmatprep.mubr.bf16.mxu0 0
  %1462 = vmatmul.mubr.bf16.gmra.mrb[0].mxu0 %v1240
  %v1463 = vpop.f32.mrb[0].mxu0
  %v1464 = vadd.f32 0.0, %v1463
  %v1465 = vpop.f32.mrb[0].mxu0
  %v1466 = vpop.f32.mrb[0].mxu0
  %v1467 = vadd.f32 0.0, %v1466
  %v1468 = vpop.f32.mrb[0].mxu0
  %1469 = vmatprep.mubr.bf16.mxu0 0
  %1470 = vmatmul.mubr.bf16.gmra.mrb[0].mxu0 %v1243
  %v1471 = vpop.f32.mrb[0].mxu0
  %v1472 = vadd.f32 0.0, %v1471
  %v1473 = vpop.f32.mrb[0].mxu0
  %v1474 = vpop.f32.mrb[0].mxu0
  %v1475 = vpop.f32.mrb[0].mxu0
  %1476 = vdwg.mxu0
  %s1477 = scalar_lea.vmem %s0, 588
  %v1478 = vld [vmem:[%s1477] sm:$0xf]
  %v1479 = vld [vmem:[%s1477 + $0x4] sm:$0xf]
  %v1480 = vld [vmem:[%s1477 + $0x8] sm:$0xf]
  %v1481 = vld [vmem:[%s1477 + $0xc] sm:$0xf]
  %v1482 = vld [vmem:[%s1477 + $0x10] sm:$0xf]
  %v1483 = vld [vmem:[%s1477 + $0x14] sm:$0xf]
  %v1484 = vld [vmem:[%s1477 + $0x18] sm:$0xf]
  %v1485 = vld [vmem:[%s1477 + $0x1c] sm:$0xf]
  %v1486 = vld [vmem:[%s1477 + $0x20] sm:$0xf]
  %v1487 = vld [vmem:[%s1477 + $0x24] sm:$0xf]
  %v1488 = vld [vmem:[%s1477 + $0x28] sm:$0xf]
  %v1489 = vld [vmem:[%s1477 + $0x2c] sm:$0xf]
  %v1490 = vld [vmem:[%s1477 + $0x30] sm:$0xf]
  %v1491 = vld [vmem:[%s1477 + $0x34] sm:$0xf]
  %v1492 = vld [vmem:[%s1477 + $0x38] sm:$0xf]
  %v1493 = vld [vmem:[%s1477 + $0x3c] sm:$0xf]
  %v1494 = vld [vmem:[%s1477 + $0x40] sm:$0xf]
  %v1495 = vld [vmem:[%s1477 + $0x44] sm:$0xf]
  %v1496 = vld [vmem:[%s1477 + $0x48] sm:$0xf]
  %v1497 = vld [vmem:[%s1477 + $0x4c] sm:$0xf]
  %v1498 = vld [vmem:[%s1477 + $0x50] sm:$0xf]
  %v1499 = vld [vmem:[%s1477 + $0x54] sm:$0xf]
  %v1500 = vld [vmem:[%s1477 + $0x58] sm:$0xf]
  %v1501 = vld [vmem:[%s1477 + $0x5c] sm:$0xf]
  %v1502 = vld [vmem:[%s1477 + $0x60] sm:$0xf]
  %v1503 = vld [vmem:[%s1477 + $0x64] sm:$0xf]
  %v1504 = vld [vmem:[%s1477 + $0x68] sm:$0xf]
  %v1505 = vld [vmem:[%s1477 + $0x6c] sm:$0xf]
  %v1506 = vld [vmem:[%s1477 + $0x70] sm:$0xf]
  %v1507 = vld [vmem:[%s1477 + $0x74] sm:$0xf]
  %v1508 = vld [vmem:[%s1477 + $0x78] sm:$0xf]
  %v1509 = vld [vmem:[%s1477 + $0x7c] sm:$0xf]
  %v1510 = vld [vmem:[%s1477 + $0x80] sm:$0xf]
  %v1511 = vld [vmem:[%s1477 + $0x84] sm:$0xf]
  %v1512 = vld [vmem:[%s1477 + $0x88] sm:$0xf]
  %v1513 = vld [vmem:[%s1477 + $0x8c] sm:$0xf]
  %v1514 = vld [vmem:[%s1477 + $0x90] sm:$0xf]
  %v1515 = vld [vmem:[%s1477 + $0x94] sm:$0xf]
  %v1516 = vld [vmem:[%s1477 + $0x98] sm:$0xf]
  %v1517 = vld [vmem:[%s1477 + $0x9c] sm:$0xf]
  %v1518 = vld [vmem:[%s1477 + $0xa0] sm:$0xf]
  %v1519 = vld [vmem:[%s1477 + $0xa4] sm:$0xf]
  %v1520 = vld [vmem:[%s1477 + $0xa8] sm:$0xf]
  %v1521 = vld [vmem:[%s1477 + $0xac] sm:$0xf]
  %v1522 = vld [vmem:[%s1477 + $0xb0] sm:$0xf]
  %v1523 = vld [vmem:[%s1477 + $0xb4] sm:$0xf]
  %v1524 = vld [vmem:[%s1477 + $0xb8] sm:$0xf]
  %v1525 = vld [vmem:[%s1477 + $0xbc] sm:$0xf]
  %v1526 = vld [vmem:[%s1477 + $0xc0] sm:$0xf]
  %v1576 = vunpack.c.l.b16 %v1478
  %v1577 = vunpack.c.l.b16 %v1479
  %v1578 = vunpack.c.l.b16 %v1480
  %v1579 = vunpack.c.l.b16 %v1481
  %v1580 = vunpack.c.l.b16 %v1482
  %v1581 = vunpack.c.l.b16 %v1483
  %v1582 = vunpack.c.l.b16 %v1484
  %v1583 = vunpack.c.l.b16 %v1485
  %v1584 = vunpack.c.l.b16 %v1486
  %v1585 = vunpack.c.l.b16 %v1487
  %v1586 = vunpack.c.l.b16 %v1488
  %v1587 = vunpack.c.l.b16 %v1489
  %v1588 = vunpack.c.l.b16 %v1490
  %v1589 = vunpack.c.l.b16 %v1491
  %v1590 = vunpack.c.l.b16 %v1492
  %v1591 = vunpack.c.l.b16 %v1493
  %v1592 = vunpack.c.l.b16 %v1494
  %v1593 = vunpack.c.l.b16 %v1495
  %v1594 = vunpack.c.l.b16 %v1496
  %v1595 = vunpack.c.l.b16 %v1497
  %v1596 = vunpack.c.l.b16 %v1498
  %v1597 = vunpack.c.l.b16 %v1499
  %v1598 = vunpack.c.l.b16 %v1500
  %v1599 = vunpack.c.l.b16 %v1501
  %v1600 = vunpack.c.l.b16 %v1502
  %v1601 = vunpack.c.l.b16 %v1503
  %v1602 = vunpack.c.l.b16 %v1504
  %v1603 = vunpack.c.l.b16 %v1505
  %v1604 = vunpack.c.l.b16 %v1506
  %v1605 = vunpack.c.l.b16 %v1507
  %v1606 = vunpack.c.l.b16 %v1508
  %v1607 = vunpack.c.l.b16 %v1509
  %v1608 = vunpack.c.l.b16 %v1510
  %v1609 = vunpack.c.l.b16 %v1511
  %v1610 = vunpack.c.l.b16 %v1512
  %v1611 = vunpack.c.l.b16 %v1513
  %v1612 = vunpack.c.l.b16 %v1514
  %v1613 = vunpack.c.l.b16 %v1515
  %v1614 = vunpack.c.l.b16 %v1516
  %v1615 = vunpack.c.l.b16 %v1517
  %v1616 = vunpack.c.l.b16 %v1518
  %v1617 = vunpack.c.l.b16 %v1519
  %v1618 = vunpack.c.l.b16 %v1520
  %v1619 = vunpack.c.l.b16 %v1521
  %v1620 = vunpack.c.l.b16 %v1522
  %v1621 = vunpack.c.l.b16 %v1523
  %v1622 = vunpack.c.l.b16 %v1524
  %v1623 = vunpack.c.l.b16 %v1525
  %v1624 = vunpack.c.l.b16 %v1526
  %v1625 = vpack.c.b16 %v1577, %v1576
  %v1626 = vpack.c.b16 %v1579, %v1578
  %v1627 = vpack.c.b16 %v1581, %v1580
  %v1628 = vpack.c.b16 %v1583, %v1582
  %v1629 = vpack.c.b16 %v1585, %v1584
  %v1630 = vpack.c.b16 %v1587, %v1586
  %v1631 = vpack.c.b16 %v1589, %v1588
  %v1632 = vpack.c.b16 %v1591, %v1590
  %v1633 = vpack.c.b16 %v1593, %v1592
  %v1634 = vpack.c.b16 %v1595, %v1594
  %v1635 = vpack.c.b16 %v1597, %v1596
  %v1636 = vpack.c.b16 %v1599, %v1598
  %v1637 = vpack.c.b16 %v1601, %v1600
  %v1638 = vpack.c.b16 %v1603, %v1602
  %v1639 = vpack.c.b16 %v1605, %v1604
  %v1640 = vpack.c.b16 %v1607, %v1606
  %v1641 = vpack.c.b16 %v1609, %v1608
  %v1642 = vpack.c.b16 %v1611, %v1610
  %v1643 = vpack.c.b16 %v1613, %v1612
  %v1644 = vpack.c.b16 %v1615, %v1614
  %v1645 = vpack.c.b16 %v1617, %v1616
  %v1646 = vpack.c.b16 %v1619, %v1618
  %v1647 = vpack.c.b16 %v1621, %v1620
  %v1648 = vpack.c.b16 %v1623, %v1622
  %v1649 = vpack.c.b16 %v1624, %v1624
  %v1651 = vsel %vm202, %v1625, 0
  %v1654 = vsel %vm202, %v1626, 0
  %v1657 = vsel %vm202, %v1627, 0
  %v1660 = vsel %vm202, %v1628, 0
  %v1663 = vsel %vm202, %v1629, 0
  %v1666 = vsel %vm202, %v1630, 0
  %v1669 = vsel %vm202, %v1631, 0
  %v1672 = vsel %vm202, %v1632, 0
  %v1675 = vsel %vm202, %v1633, 0
  %v1678 = vsel %vm202, %v1634, 0
  %v1681 = vsel %vm202, %v1635, 0
  %v1684 = vsel %vm202, %v1636, 0
  %v1687 = vsel %vm202, %v1637, 0
  %v1690 = vsel %vm202, %v1638, 0
  %v1693 = vsel %vm202, %v1639, 0
  %v1696 = vsel %vm202, %v1640, 0
  %v1699 = vsel %vm202, %v1641, 0
  %v1702 = vsel %vm202, %v1642, 0
  %v1705 = vsel %vm202, %v1643, 0
  %v1708 = vsel %vm202, %v1644, 0
  %v1711 = vsel %vm202, %v1645, 0
  %v1714 = vsel %vm202, %v1646, 0
  %v1717 = vsel %vm202, %v1647, 0
  %v1720 = vsel %vm202, %v1648, 0
  %v1723 = vsel %vm202, %v1649, 0
  %1725 = vmatprep.subr.bf16.mxu0 0
  %1726 = vmatpush1.bf16.msra.mxu0 %v199
  %1727 = vmatprep.subr.bf16.mxu0 0
  %1728 = vmatpush1.bf16.msra.mxu0 %v283
  %1729 = vmatprep.subr.bf16.mxu0 0
  %1730 = vmatpush1.bf16.msra.mxu0 0
  %1731 = vmatprep.subr.bf16.mxu0 0
  %1732 = vmatpush1.bf16.msra.mxu0 0
  %1733 = vmatprep.subr.bf16.mxu0 0
  %1734 = vmatpush1.bf16.msra.mxu0 0
  %1735 = vmatprep.subr.bf16.mxu0 0
  %1736 = vmatpush1.bf16.msra.mxu0 0
  %1737 = vmatprep.subr.bf16.mxu0 0
  %1738 = vmatpush1.bf16.msra.mxu0 0
  %1739 = vmatprep.subr.bf16.mxu0 0
  %1740 = vmatpush1.bf16.msra.mxu0 0
  %1741 = vmatprep.subr.bf16.mxu0 0
  %1742 = vmatpush1.bf16.msra.mxu0 0
  %1743 = vmatprep.subr.bf16.mxu0 0
  %1744 = vmatpush1.bf16.msra.mxu0 0
  %1745 = vmatprep.subr.bf16.mxu0 0
  %1746 = vmatpush1.bf16.msra.mxu0 0
  %1747 = vmatprep.subr.bf16.mxu0 0
  %1748 = vmatpush1.bf16.msra.mxu0 0
  %1749 = vmatprep.subr.bf16.mxu0 0
  %1750 = vmatpush1.bf16.msra.mxu0 0
  %1751 = vmatprep.subr.bf16.mxu0 0
  %1752 = vmatpush1.bf16.msra.mxu0 0
  %1753 = vmatprep.subr.bf16.mxu0 0
  %1754 = vmatpush1.bf16.msra.mxu0 0
  %1755 = vmatprep.subr.bf16.mxu0 0
  %1756 = vmatpush1.bf16.msra.mxu0 0
  %1757 = vmatprep.mubr.bf16.mxu0 0
  %1758 = vmatmul.mubr.bf16.gmra.mrb[0].mxu0 %v1651
  %v1759 = vpop.f32.mrb[0].mxu0
  %v1760 = vadd.f32 0.0, %v1759
  %v1761 = vpop.f32.mrb[0].mxu0
  %v1762 = vpop.f32.mrb[0].mxu0
  %v1763 = vadd.f32 0.0, %v1762
  %v1764 = vpop.f32.mrb[0].mxu0
  %1765 = vmatprep.mubr.bf16.mxu0 0
  %1766 = vmatmul.mubr.bf16.gmra.mrb[0].mxu0 %v1654
  %v1767 = vpop.f32.mrb[0].mxu0
  %v1768 = vadd.f32 0.0, %v1767
  %v1769 = vpop.f32.mrb[0].mxu0
  %v1770 = vpop.f32.mrb[0].mxu0
  %v1771 = vadd.f32 0.0, %v1770
  %v1772 = vpop.f32.mrb[0].mxu0
  %1773 = vmatprep.mubr.bf16.mxu0 0
  %1774 = vmatmul.mubr.bf16.gmra.mrb[0].mxu0 %v1657
  %v1775 = vpop.f32.mrb[0].mxu0
  %v1776 = vadd.f32 0.0, %v1775
  %v1777 = vpop.f32.mrb[0].mxu0
  %v1778 = vpop.f32.mrb[0].mxu0
  %v1779 = vadd.f32 0.0, %v1778
  %v1780 = vpop.f32.mrb[0].mxu0
  %1781 = vmatprep.mubr.bf16.mxu0 0
  %1782 = vmatmul.mubr.bf16.gmra.mrb[0].mxu0 %v1660
  %v1783 = vpop.f32.mrb[0].mxu0
  %v1784 = vadd.f32 0.0, %v1783
  %v1785 = vpop.f32.mrb[0].mxu0
  %v1786 = vpop.f32.mrb[0].mxu0
  %v1787 = vadd.f32 0.0, %v1786
  %v1788 = vpop.f32.mrb[0].mxu0
  %1789 = vmatprep.mubr.bf16.mxu0 0
  %1790 = vmatmul.mubr.bf16.gmra.mrb[0].mxu0 %v1663
  %v1791 = vpop.f32.mrb[0].mxu0
  %v1792 = vadd.f32 0.0, %v1791
  %v1793 = vpop.f32.mrb[0].mxu0
  %v1794 = vpop.f32.mrb[0].mxu0
  %v1795 = vadd.f32 0.0, %v1794
  %v1796 = vpop.f32.mrb[0].mxu0
  %1797 = vmatprep.mubr.bf16.mxu0 0
  %1798 = vmatmul.mubr.bf16.gmra.mrb[0].mxu0 %v1666
  %v1799 = vpop.f32.mrb[0].mxu0
  %v1800 = vadd.f32 0.0, %v1799
  %v1801 = vpop.f32.mrb[0].mxu0
  %v1802 = vpop.f32.mrb[0].mxu0
  %v1803 = vadd.f32 0.0, %v1802
  %v1804 = vpop.f32.mrb[0].mxu0
  %1805 = vmatprep.mubr.bf16.mxu0 0
  %1806 = vmatmul.mubr.bf16.gmra.mrb[0].mxu0 %v1669
  %v1807 = vpop.f32.mrb[0].mxu0
  %v1808 = vadd.f32 0.0, %v1807
  %v1809 = vpop.f32.mrb[0].mxu0
  %v1810 = vpop.f32.mrb[0].mxu0
  %v1811 = vadd.f32 0.0, %v1810
  %v1812 = vpop.f32.mrb[0].mxu0
  %1813 = vmatprep.mubr.bf16.mxu0 0
  %1814 = vmatmul.mubr.bf16.gmra.mrb[0].mxu0 %v1672
  %v1815 = vpop.f32.mrb[0].mxu0
  %v1816 = vadd.f32 0.0, %v1815
  %v1817 = vpop.f32.mrb[0].mxu0
  %v1818 = vpop.f32.mrb[0].mxu0
  %v1819 = vadd.f32 0.0, %v1818
  %v1820 = vpop.f32.mrb[0].mxu0
  %1821 = vmatprep.mubr.bf16.mxu0 0
  %1822 = vmatmul.mubr.bf16.gmra.mrb[0].mxu0 %v1675
  %v1823 = vpop.f32.mrb[0].mxu0
  %v1824 = vadd.f32 0.0, %v1823
  %v1825 = vpop.f32.mrb[0].mxu0
  %v1826 = vpop.f32.mrb[0].mxu0
  %v1827 = vadd.f32 0.0, %v1826
  %v1828 = vpop.f32.mrb[0].mxu0
  %1829 = vmatprep.mubr.bf16.mxu0 0
  %1830 = vmatmul.mubr.bf16.gmra.mrb[0].mxu0 %v1678
  %v1831 = vpop.f32.mrb[0].mxu0
  %v1832 = vadd.f32 0.0, %v1831
  %v1833 = vpop.f32.mrb[0].mxu0
  %v1834 = vpop.f32.mrb[0].mxu0
  %v1835 = vadd.f32 0.0, %v1834
  %v1836 = vpop.f32.mrb[0].mxu0
  %1837 = vmatprep.mubr.bf16.mxu0 0
  %1838 = vmatmul.mubr.bf16.gmra.mrb[0].mxu0 %v1681
  %v1839 = vpop.f32.mrb[0].mxu0
  %v1840 = vadd.f32 0.0, %v1839
  %v1841 = vpop.f32.mrb[0].mxu0
  %v1842 = vpop.f32.mrb[0].mxu0
  %v1843 = vadd.f32 0.0, %v1842
  %v1844 = vpop.f32.mrb[0].mxu0
  %1845 = vmatprep.mubr.bf16.mxu0 0
  %1846 = vmatmul.mubr.bf16.gmra.mrb[0].mxu0 %v1684
  %v1847 = vpop.f32.mrb[0].mxu0
  %v1848 = vadd.f32 0.0, %v1847
  %v1849 = vpop.f32.mrb[0].mxu0
  %v1850 = vpop.f32.mrb[0].mxu0
  %v1851 = vadd.f32 0.0, %v1850
  %v1852 = vpop.f32.mrb[0].mxu0
  %1853 = vmatprep.mubr.bf16.mxu0 0
  %1854 = vmatmul.mubr.bf16.gmra.mrb[0].mxu0 %v1687
  %v1855 = vpop.f32.mrb[0].mxu0
  %v1856 = vadd.f32 0.0, %v1855
  %v1857 = vpop.f32.mrb[0].mxu0
  %v1858 = vpop.f32.mrb[0].mxu0
  %v1859 = vadd.f32 0.0, %v1858
  %v1860 = vpop.f32.mrb[0].mxu0
  %1861 = vmatprep.mubr.bf16.mxu0 0
  %1862 = vmatmul.mubr.bf16.gmra.mrb[0].mxu0 %v1690
  %v1863 = vpop.f32.mrb[0].mxu0
  %v1864 = vadd.f32 0.0, %v1863
  %v1865 = vpop.f32.mrb[0].mxu0
  %v1866 = vpop.f32.mrb[0].mxu0
  %v1867 = vadd.f32 0.0, %v1866
  %v1868 = vpop.f32.mrb[0].mxu0
  %1869 = vmatprep.mubr.bf16.mxu0 0
  %1870 = vmatmul.mubr.bf16.gmra.mrb[0].mxu0 %v1693
  %v1871 = vpop.f32.mrb[0].mxu0
  %v1872 = vadd.f32 0.0, %v1871
  %v1873 = vpop.f32.mrb[0].mxu0
  %v1874 = vpop.f32.mrb[0].mxu0
  %v1875 = vadd.f32 0.0, %v1874
  %v1876 = vpop.f32.mrb[0].mxu0
  %1877 = vmatprep.mubr.bf16.mxu0 0
  %1878 = vmatmul.mubr.bf16.gmra.mrb[0].mxu0 %v1696
  %v1879 = vpop.f32.mrb[0].mxu0
  %v1880 = vadd.f32 0.0, %v1879
  %v1881 = vpop.f32.mrb[0].mxu0
  %v1882 = vpop.f32.mrb[0].mxu0
  %v1883 = vadd.f32 0.0, %v1882
  %v1884 = vpop.f32.mrb[0].mxu0
  %1885 = vmatprep.mubr.bf16.mxu0 0
  %1886 = vmatmul.mubr.bf16.gmra.mrb[0].mxu0 %v1699
  %v1887 = vpop.f32.mrb[0].mxu0
  %v1888 = vadd.f32 0.0, %v1887
  %v1889 = vpop.f32.mrb[0].mxu0
  %v1890 = vpop.f32.mrb[0].mxu0
  %v1891 = vadd.f32 0.0, %v1890
  %v1892 = vpop.f32.mrb[0].mxu0
  %1893 = vmatprep.mubr.bf16.mxu0 0
  %1894 = vmatmul.mubr.bf16.gmra.mrb[0].mxu0 %v1702
  %v1895 = vpop.f32.mrb[0].mxu0
  %v1896 = vadd.f32 0.0, %v1895
  %v1897 = vpop.f32.mrb[0].mxu0
  %v1898 = vpop.f32.mrb[0].mxu0
  %v1899 = vadd.f32 0.0, %v1898
  %v1900 = vpop.f32.mrb[0].mxu0
  %1901 = vmatprep.mubr.bf16.mxu0 0
  %1902 = vmatmul.mubr.bf16.gmra.mrb[0].mxu0 %v1705
  %v1903 = vpop.f32.mrb[0].mxu0
  %v1904 = vadd.f32 0.0, %v1903
  %v1905 = vpop.f32.mrb[0].mxu0
  %v1906 = vpop.f32.mrb[0].mxu0
  %v1907 = vadd.f32 0.0, %v1906
  %v1908 = vpop.f32.mrb[0].mxu0
  %1909 = vmatprep.mubr.bf16.mxu0 0
  %1910 = vmatmul.mubr.bf16.gmra.mrb[0].mxu0 %v1708
  %v1911 = vpop.f32.mrb[0].mxu0
  %v1912 = vadd.f32 0.0, %v1911
  %v1913 = vpop.f32.mrb[0].mxu0
  %v1914 = vpop.f32.mrb[0].mxu0
  %v1915 = vadd.f32 0.0, %v1914
  %v1916 = vpop.f32.mrb[0].mxu0
  %1917 = vmatprep.mubr.bf16.mxu0 0
  %1918 = vmatmul.mubr.bf16.gmra.mrb[0].mxu0 %v1711
  %v1919 = vpop.f32.mrb[0].mxu0
  %v1920 = vadd.f32 0.0, %v1919
  %v1921 = vpop.f32.mrb[0].mxu0
  %v1922 = vpop.f32.mrb[0].mxu0
  %v1923 = vadd.f32 0.0, %v1922
  %v1924 = vpop.f32.mrb[0].mxu0
  %1925 = vmatprep.mubr.bf16.mxu0 0
  %1926 = vmatmul.mubr.bf16.gmra.mrb[0].mxu0 %v1714
  %v1927 = vpop.f32.mrb[0].mxu0
  %v1928 = vadd.f32 0.0, %v1927
  %v1929 = vpop.f32.mrb[0].mxu0
  %v1930 = vpop.f32.mrb[0].mxu0
  %v1931 = vadd.f32 0.0, %v1930
  %v1932 = vpop.f32.mrb[0].mxu0
  %1933 = vmatprep.mubr.bf16.mxu0 0
  %1934 = vmatmul.mubr.bf16.gmra.mrb[0].mxu0 %v1717
  %v1935 = vpop.f32.mrb[0].mxu0
  %v1936 = vadd.f32 0.0, %v1935
  %v1937 = vpop.f32.mrb[0].mxu0
  %v1938 = vpop.f32.mrb[0].mxu0
  %v1939 = vadd.f32 0.0, %v1938
  %v1940 = vpop.f32.mrb[0].mxu0
  %1941 = vmatprep.mubr.bf16.mxu0 0
  %1942 = vmatmul.mubr.bf16.gmra.mrb[0].mxu0 %v1720
  %v1943 = vpop.f32.mrb[0].mxu0
  %v1944 = vadd.f32 0.0, %v1943
  %v1945 = vpop.f32.mrb[0].mxu0
  %v1946 = vpop.f32.mrb[0].mxu0
  %v1947 = vadd.f32 0.0, %v1946
  %v1948 = vpop.f32.mrb[0].mxu0
  %1949 = vmatprep.mubr.bf16.mxu0 0
  %1950 = vmatmul.mubr.bf16.gmra.mrb[0].mxu0 %v1723
  %v1951 = vpop.f32.mrb[0].mxu0
  %v1952 = vadd.f32 0.0, %v1951
  %v1953 = vpop.f32.mrb[0].mxu0
  %v1954 = vpop.f32.mrb[0].mxu0
  %v1955 = vpop.f32.mrb[0].mxu0
  %1956 = vdwg.mxu0
  %v1957 = vmax.f32 %v320, %v800
  %v1958 = vmax.f32 %v323, %v803
  %v1959 = vmax.f32 %v328, %v808
  %v1960 = vmax.f32 %v331, %v811
  %v1961 = vmax.f32 %v336, %v816
  %v1962 = vmax.f32 %v339, %v819
  %v1963 = vmax.f32 %v344, %v824
  %v1964 = vmax.f32 %v347, %v827
  %v1965 = vmax.f32 %v352, %v832
  %v1966 = vmax.f32 %v355, %v835
  %v1967 = vmax.f32 %v360, %v840
  %v1968 = vmax.f32 %v363, %v843
  %v1969 = vmax.f32 %v368, %v848
  %v1970 = vmax.f32 %v371, %v851
  %v1971 = vmax.f32 %v376, %v856
  %v1972 = vmax.f32 %v379, %v859
  %v1973 = vmax.f32 %v384, %v864
  %v1974 = vmax.f32 %v387, %v867
  %v1975 = vmax.f32 %v392, %v872
  %v1976 = vmax.f32 %v395, %v875
  %v1977 = vmax.f32 %v400, %v880
  %v1978 = vmax.f32 %v403, %v883
  %v1979 = vmax.f32 %v408, %v888
  %v1980 = vmax.f32 %v411, %v891
  %v1981 = vmax.f32 %v416, %v896
  %v1982 = vmax.f32 %v419, %v899
  %v1983 = vmax.f32 %v424, %v904
  %v1984 = vmax.f32 %v427, %v907
  %v1985 = vmax.f32 %v432, %v912
  %v1986 = vmax.f32 %v435, %v915
  %v1987 = vmax.f32 %v440, %v920
  %v1988 = vmax.f32 %v443, %v923
  %v1989 = vmax.f32 %v448, %v928
  %v1990 = vmax.f32 %v451, %v931
  %v1991 = vmax.f32 %v456, %v936
  %v1992 = vmax.f32 %v459, %v939
  %v1993 = vmax.f32 %v464, %v944
  %v1994 = vmax.f32 %v467, %v947
  %v1995 = vmax.f32 %v472, %v952
  %v1996 = vmax.f32 %v475, %v955
  %v1997 = vmax.f32 %v480, %v960
  %v1998 = vmax.f32 %v483, %v963
  %v1999 = vmax.f32 %v488, %v968
  %v2000 = vmax.f32 %v491, %v971
  %v2001 = vmax.f32 %v496, %v976
  %v2002 = vmax.f32 %v499, %v979
  %v2003 = vmax.f32 %v504, %v984
  %v2004 = vmax.f32 %v507, %v987
  %v2005 = vmax.f32 %v512, %v992
  %v2006 = vmax.f32 %v1280, %v1760
  %v2007 = vmax.f32 %v1283, %v1763
  %v2008 = vmax.f32 %v1288, %v1768
  %v2009 = vmax.f32 %v1291, %v1771
  %v2010 = vmax.f32 %v1296, %v1776
  %v2011 = vmax.f32 %v1299, %v1779
  %v2012 = vmax.f32 %v1304, %v1784
  %v2013 = vmax.f32 %v1307, %v1787
  %v2014 = vmax.f32 %v1312, %v1792
  %v2015 = vmax.f32 %v1315, %v1795
  %v2016 = vmax.f32 %v1320, %v1800
  %v2017 = vmax.f32 %v1323, %v1803
  %v2018 = vmax.f32 %v1328, %v1808
  %v2019 = vmax.f32 %v1331, %v1811
  %v2020 = vmax.f32 %v1336, %v1816
  %v2021 = vmax.f32 %v1339, %v1819
  %v2022 = vmax.f32 %v1344, %v1824
  %v2023 = vmax.f32 %v1347, %v1827
  %v2024 = vmax.f32 %v1352, %v1832
  %v2025 = vmax.f32 %v1355, %v1835
  %v2026 = vmax.f32 %v1360, %v1840
  %v2027 = vmax.f32 %v1363, %v1843
  %v2028 = vmax.f32 %v1368, %v1848
  %v2029 = vmax.f32 %v1371, %v1851
  %v2030 = vmax.f32 %v1376, %v1856
  %v2031 = vmax.f32 %v1379, %v1859
  %v2032 = vmax.f32 %v1384, %v1864
  %v2033 = vmax.f32 %v1387, %v1867
  %v2034 = vmax.f32 %v1392, %v1872
  %v2035 = vmax.f32 %v1395, %v1875
  %v2036 = vmax.f32 %v1400, %v1880
  %v2037 = vmax.f32 %v1403, %v1883
  %v2038 = vmax.f32 %v1408, %v1888
  %v2039 = vmax.f32 %v1411, %v1891
  %v2040 = vmax.f32 %v1416, %v1896
  %v2041 = vmax.f32 %v1419, %v1899
  %v2042 = vmax.f32 %v1424, %v1904
  %v2043 = vmax.f32 %v1427, %v1907
  %v2044 = vmax.f32 %v1432, %v1912
  %v2045 = vmax.f32 %v1435, %v1915
  %v2046 = vmax.f32 %v1440, %v1920
  %v2047 = vmax.f32 %v1443, %v1923
  %v2048 = vmax.f32 %v1448, %v1928
  %v2049 = vmax.f32 %v1451, %v1931
  %v2050 = vmax.f32 %v1456, %v1936
  %v2051 = vmax.f32 %v1459, %v1939
  %v2052 = vmax.f32 %v1464, %v1944
  %v2053 = vmax.f32 %v1467, %v1947
  %v2054 = vmax.f32 %v1472, %v1952
  %v2055 = vmax.f32 %v1957, %v2006
  %v2056 = vmax.f32 %v1958, %v2007
  %v2057 = vmax.f32 %v1959, %v2008
  %v2058 = vmax.f32 %v1960, %v2009
  %v2059 = vmax.f32 %v1961, %v2010
  %v2060 = vmax.f32 %v1962, %v2011
  %v2061 = vmax.f32 %v1963, %v2012
  %v2062 = vmax.f32 %v1964, %v2013
  %v2063 = vmax.f32 %v1965, %v2014
  %v2064 = vmax.f32 %v1966, %v2015
  %v2065 = vmax.f32 %v1967, %v2016
  %v2066 = vmax.f32 %v1968, %v2017
  %v2067 = vmax.f32 %v1969, %v2018
  %v2068 = vmax.f32 %v1970, %v2019
  %v2069 = vmax.f32 %v1971, %v2020
  %v2070 = vmax.f32 %v1972, %v2021
  %v2071 = vmax.f32 %v1973, %v2022
  %v2072 = vmax.f32 %v1974, %v2023
  %v2073 = vmax.f32 %v1975, %v2024
  %v2074 = vmax.f32 %v1976, %v2025
  %v2075 = vmax.f32 %v1977, %v2026
  %v2076 = vmax.f32 %v1978, %v2027
  %v2077 = vmax.f32 %v1979, %v2028
  %v2078 = vmax.f32 %v1980, %v2029
  %v2079 = vmax.f32 %v1981, %v2030
  %v2080 = vmax.f32 %v1982, %v2031
  %v2081 = vmax.f32 %v1983, %v2032
  %v2082 = vmax.f32 %v1984, %v2033
  %v2083 = vmax.f32 %v1985, %v2034
  %v2084 = vmax.f32 %v1986, %v2035
  %v2085 = vmax.f32 %v1987, %v2036
  %v2086 = vmax.f32 %v1988, %v2037
  %v2087 = vmax.f32 %v1989, %v2038
  %v2088 = vmax.f32 %v1990, %v2039
  %v2089 = vmax.f32 %v1991, %v2040
  %v2090 = vmax.f32 %v1992, %v2041
  %v2091 = vmax.f32 %v1993, %v2042
  %v2092 = vmax.f32 %v1994, %v2043
  %v2093 = vmax.f32 %v1995, %v2044
  %v2094 = vmax.f32 %v1996, %v2045
  %v2095 = vmax.f32 %v1997, %v2046
  %v2096 = vmax.f32 %v1998, %v2047
  %v2097 = vmax.f32 %v1999, %v2048
  %v2098 = vmax.f32 %v2000, %v2049
  %v2099 = vmax.f32 %v2001, %v2050
  %v2100 = vmax.f32 %v2002, %v2051
  %v2101 = vmax.f32 %v2003, %v2052
  %v2102 = vmax.f32 %v2004, %v2053
  %v2103 = vmax.f32 %v2005, %v2054
  %v2104 = vld [vmem:[%s2] sm:$0x1]
  %v2106 = vlaneseq
  %v2107 = vshrl.u32 %v2106, 7
  %v2108 = vsub.s32 0, %v2107
  %v2109 = vrot.slane %v2104, %v2108
  %v2111 = vadd.f32 %v2055, %v2109
  %v2112 = vadd.f32 %v2056, %v2109
  %v2113 = vadd.f32 %v2057, %v2109
  %v2114 = vadd.f32 %v2058, %v2109
  %v2115 = vadd.f32 %v2059, %v2109
  %v2116 = vadd.f32 %v2060, %v2109
  %v2117 = vadd.f32 %v2061, %v2109
  %v2118 = vadd.f32 %v2062, %v2109
  %v2119 = vadd.f32 %v2063, %v2109
  %v2120 = vadd.f32 %v2064, %v2109
  %v2121 = vadd.f32 %v2065, %v2109
  %v2122 = vadd.f32 %v2066, %v2109
  %v2123 = vadd.f32 %v2067, %v2109
  %v2124 = vadd.f32 %v2068, %v2109
  %v2125 = vadd.f32 %v2069, %v2109
  %v2126 = vadd.f32 %v2070, %v2109
  %v2127 = vadd.f32 %v2071, %v2109
  %v2128 = vadd.f32 %v2072, %v2109
  %v2129 = vadd.f32 %v2073, %v2109
  %v2130 = vadd.f32 %v2074, %v2109
  %v2131 = vadd.f32 %v2075, %v2109
  %v2132 = vadd.f32 %v2076, %v2109
  %v2133 = vadd.f32 %v2077, %v2109
  %v2134 = vadd.f32 %v2078, %v2109
  %v2135 = vadd.f32 %v2079, %v2109
  %v2136 = vadd.f32 %v2080, %v2109
  %v2137 = vadd.f32 %v2081, %v2109
  %v2138 = vadd.f32 %v2082, %v2109
  %v2139 = vadd.f32 %v2083, %v2109
  %v2140 = vadd.f32 %v2084, %v2109
  %v2141 = vadd.f32 %v2085, %v2109
  %v2142 = vadd.f32 %v2086, %v2109
  %v2143 = vadd.f32 %v2087, %v2109
  %v2144 = vadd.f32 %v2088, %v2109
  %v2145 = vadd.f32 %v2089, %v2109
  %v2146 = vadd.f32 %v2090, %v2109
  %v2147 = vadd.f32 %v2091, %v2109
  %v2148 = vadd.f32 %v2092, %v2109
  %v2149 = vadd.f32 %v2093, %v2109
  %v2150 = vadd.f32 %v2094, %v2109
  %v2151 = vadd.f32 %v2095, %v2109
  %v2152 = vadd.f32 %v2096, %v2109
  %v2153 = vadd.f32 %v2097, %v2109
  %v2154 = vadd.f32 %v2098, %v2109
  %v2155 = vadd.f32 %v2099, %v2109
  %v2156 = vadd.f32 %v2100, %v2109
  %v2157 = vadd.f32 %v2101, %v2109
  %v2158 = vadd.f32 %v2102, %v2109
  %v2159 = vadd.f32 %v2103, %v2109
  %v2160 = vmul.f32 %v2111, 0.2
  %v2161 = vmul.f32 %v2112, 0.2
  %v2162 = vmul.f32 %v2113, 0.2
  %v2163 = vmul.f32 %v2114, 0.2
  %v2164 = vmul.f32 %v2115, 0.2
  %v2165 = vmul.f32 %v2116, 0.2
  %v2166 = vmul.f32 %v2117, 0.2
  %v2167 = vmul.f32 %v2118, 0.2
  %v2168 = vmul.f32 %v2119, 0.2
  %v2169 = vmul.f32 %v2120, 0.2
  %v2170 = vmul.f32 %v2121, 0.2
  %v2171 = vmul.f32 %v2122, 0.2
  %v2172 = vmul.f32 %v2123, 0.2
  %v2173 = vmul.f32 %v2124, 0.2
  %v2174 = vmul.f32 %v2125, 0.2
  %v2175 = vmul.f32 %v2126, 0.2
  %v2176 = vmul.f32 %v2127, 0.2
  %v2177 = vmul.f32 %v2128, 0.2
  %v2178 = vmul.f32 %v2129, 0.2
  %v2179 = vmul.f32 %v2130, 0.2
  %v2180 = vmul.f32 %v2131, 0.2
  %v2181 = vmul.f32 %v2132, 0.2
  %v2182 = vmul.f32 %v2133, 0.2
  %v2183 = vmul.f32 %v2134, 0.2
  %v2184 = vmul.f32 %v2135, 0.2
  %v2185 = vmul.f32 %v2136, 0.2
  %v2186 = vmul.f32 %v2137, 0.2
  %v2187 = vmul.f32 %v2138, 0.2
  %v2188 = vmul.f32 %v2139, 0.2
  %v2189 = vmul.f32 %v2140, 0.2
  %v2190 = vmul.f32 %v2141, 0.2
  %v2191 = vmul.f32 %v2142, 0.2
  %v2192 = vmul.f32 %v2143, 0.2
  %v2193 = vmul.f32 %v2144, 0.2
  %v2194 = vmul.f32 %v2145, 0.2
  %v2195 = vmul.f32 %v2146, 0.2
  %v2196 = vmul.f32 %v2147, 0.2
  %v2197 = vmul.f32 %v2148, 0.2
  %v2198 = vmul.f32 %v2149, 0.2
  %v2199 = vmul.f32 %v2150, 0.2
  %v2200 = vmul.f32 %v2151, 0.2
  %v2201 = vmul.f32 %v2152, 0.2
  %v2202 = vmul.f32 %v2153, 0.2
  %v2203 = vmul.f32 %v2154, 0.2
  %v2204 = vmul.f32 %v2155, 0.2
  %v2205 = vmul.f32 %v2156, 0.2
  %v2206 = vmul.f32 %v2157, 0.2
  %v2207 = vmul.f32 %v2158, 0.2
  %v2208 = vmul.f32 %v2159, 0.2
  %v2209 = vmax.f32 %v2111, %v2160
  %v2210 = vmax.f32 %v2112, %v2161
  %v2211 = vmax.f32 %v2113, %v2162
  %v2212 = vmax.f32 %v2114, %v2163
  %v2213 = vmax.f32 %v2115, %v2164
  %v2214 = vmax.f32 %v2116, %v2165
  %v2215 = vmax.f32 %v2117, %v2166
  %v2216 = vmax.f32 %v2118, %v2167
  %v2217 = vmax.f32 %v2119, %v2168
  %v2218 = vmax.f32 %v2120, %v2169
  %v2219 = vmax.f32 %v2121, %v2170
  %v2220 = vmax.f32 %v2122, %v2171
  %v2221 = vmax.f32 %v2123, %v2172
  %v2222 = vmax.f32 %v2124, %v2173
  %v2223 = vmax.f32 %v2125, %v2174
  %v2224 = vmax.f32 %v2126, %v2175
  %v2225 = vmax.f32 %v2127, %v2176
  %v2226 = vmax.f32 %v2128, %v2177
  %v2227 = vmax.f32 %v2129, %v2178
  %v2228 = vmax.f32 %v2130, %v2179
  %v2229 = vmax.f32 %v2131, %v2180
  %v2230 = vmax.f32 %v2132, %v2181
  %v2231 = vmax.f32 %v2133, %v2182
  %v2232 = vmax.f32 %v2134, %v2183
  %v2233 = vmax.f32 %v2135, %v2184
  %v2234 = vmax.f32 %v2136, %v2185
  %v2235 = vmax.f32 %v2137, %v2186
  %v2236 = vmax.f32 %v2138, %v2187
  %v2237 = vmax.f32 %v2139, %v2188
  %v2238 = vmax.f32 %v2140, %v2189
  %v2239 = vmax.f32 %v2141, %v2190
  %v2240 = vmax.f32 %v2142, %v2191
  %v2241 = vmax.f32 %v2143, %v2192
  %v2242 = vmax.f32 %v2144, %v2193
  %v2243 = vmax.f32 %v2145, %v2194
  %v2244 = vmax.f32 %v2146, %v2195
  %v2245 = vmax.f32 %v2147, %v2196
  %v2246 = vmax.f32 %v2148, %v2197
  %v2247 = vmax.f32 %v2149, %v2198
  %v2248 = vmax.f32 %v2150, %v2199
  %v2249 = vmax.f32 %v2151, %v2200
  %v2250 = vmax.f32 %v2152, %v2201
  %v2251 = vmax.f32 %v2153, %v2202
  %v2252 = vmax.f32 %v2154, %v2203
  %v2253 = vmax.f32 %v2155, %v2204
  %v2254 = vmax.f32 %v2156, %v2205
  %v2255 = vmax.f32 %v2157, %v2206
  %v2256 = vmax.f32 %v2158, %v2207
  %v2257 = vmax.f32 %v2159, %v2208
  %v2258 = vpack.c.bf16 %v2210, %v2209
  %v2259 = vpack.c.bf16 %v2212, %v2211
  %v2260 = vpack.c.bf16 %v2214, %v2213
  %v2261 = vpack.c.bf16 %v2216, %v2215
  %v2262 = vpack.c.bf16 %v2218, %v2217
  %v2263 = vpack.c.bf16 %v2220, %v2219
  %v2264 = vpack.c.bf16 %v2222, %v2221
  %v2265 = vpack.c.bf16 %v2224, %v2223
  %v2266 = vpack.c.bf16 %v2226, %v2225
  %v2267 = vpack.c.bf16 %v2228, %v2227
  %v2268 = vpack.c.bf16 %v2230, %v2229
  %v2269 = vpack.c.bf16 %v2232, %v2231
  %v2270 = vpack.c.bf16 %v2234, %v2233
  %v2271 = vpack.c.bf16 %v2236, %v2235
  %v2272 = vpack.c.bf16 %v2238, %v2237
  %v2273 = vpack.c.bf16 %v2240, %v2239
  %v2274 = vpack.c.bf16 %v2242, %v2241
  %v2275 = vpack.c.bf16 %v2244, %v2243
  %v2276 = vpack.c.bf16 %v2246, %v2245
  %v2277 = vpack.c.bf16 %v2248, %v2247
  %v2278 = vpack.c.bf16 %v2250, %v2249
  %v2279 = vpack.c.bf16 %v2252, %v2251
  %v2280 = vpack.c.bf16 %v2254, %v2253
  %v2281 = vpack.c.bf16 %v2256, %v2255
  %v2282 = vpack.c.bf16 %v2257, %v2257
  %v2308 = vunpack.c.l.b16 %v2258
  %v2309 = vunpack.c.h.b16 %v2258
  %v2310 = vunpack.c.l.b16 %v2259
  %v2311 = vunpack.c.h.b16 %v2259
  %v2312 = vunpack.c.l.b16 %v2260
  %v2313 = vunpack.c.h.b16 %v2260
  %v2314 = vunpack.c.l.b16 %v2261
  %v2315 = vunpack.c.h.b16 %v2261
  %v2316 = vunpack.c.l.b16 %v2262
  %v2317 = vunpack.c.h.b16 %v2262
  %v2318 = vunpack.c.l.b16 %v2263
  %v2319 = vunpack.c.h.b16 %v2263
  %v2320 = vunpack.c.l.b16 %v2264
  %v2321 = vunpack.c.h.b16 %v2264
  %v2322 = vunpack.c.l.b16 %v2265
  %v2323 = vunpack.c.h.b16 %v2265
  %v2324 = vunpack.c.l.b16 %v2266
  %v2325 = vunpack.c.h.b16 %v2266
  %v2326 = vunpack.c.l.b16 %v2267
  %v2327 = vunpack.c.h.b16 %v2267
  %v2328 = vunpack.c.l.b16 %v2268
  %v2329 = vunpack.c.h.b16 %v2268
  %v2330 = vunpack.c.l.b16 %v2269
  %v2331 = vunpack.c.h.b16 %v2269
  %v2332 = vunpack.c.l.b16 %v2270
  %v2333 = vunpack.c.h.b16 %v2270
  %v2334 = vunpack.c.l.b16 %v2271
  %v2335 = vunpack.c.h.b16 %v2271
  %v2336 = vunpack.c.l.b16 %v2272
  %v2337 = vunpack.c.h.b16 %v2272
  %v2338 = vunpack.c.l.b16 %v2273
  %v2339 = vunpack.c.h.b16 %v2273
  %v2340 = vunpack.c.l.b16 %v2274
  %v2341 = vunpack.c.h.b16 %v2274
  %v2342 = vunpack.c.l.b16 %v2275
  %v2343 = vunpack.c.h.b16 %v2275
  %v2344 = vunpack.c.l.b16 %v2276
  %v2345 = vunpack.c.h.b16 %v2276
  %v2346 = vunpack.c.l.b16 %v2277
  %v2347 = vunpack.c.h.b16 %v2277
  %v2348 = vunpack.c.l.b16 %v2278
  %v2349 = vunpack.c.h.b16 %v2278
  %v2350 = vunpack.c.l.b16 %v2279
  %v2351 = vunpack.c.h.b16 %v2279
  %v2352 = vunpack.c.l.b16 %v2280
  %v2353 = vunpack.c.h.b16 %v2280
  %v2354 = vunpack.c.l.b16 %v2281
  %v2355 = vunpack.c.h.b16 %v2281
  %v2356 = vunpack.c.l.b16 %v2282
  %v2357 = vpack.c.b16 %v2308, %v2308
  %v2358 = vpack.c.b16 %v2309, %v2309
  %v2359 = vpack.c.b16 %v2310, %v2310
  %v2360 = vpack.c.b16 %v2311, %v2311
  %v2361 = vpack.c.b16 %v2312, %v2312
  %v2362 = vpack.c.b16 %v2313, %v2313
  %v2363 = vpack.c.b16 %v2314, %v2314
  %v2364 = vpack.c.b16 %v2315, %v2315
  %v2365 = vpack.c.b16 %v2316, %v2316
  %v2366 = vpack.c.b16 %v2317, %v2317
  %v2367 = vpack.c.b16 %v2318, %v2318
  %v2368 = vpack.c.b16 %v2319, %v2319
  %v2369 = vpack.c.b16 %v2320, %v2320
  %v2370 = vpack.c.b16 %v2321, %v2321
  %v2371 = vpack.c.b16 %v2322, %v2322
  %v2372 = vpack.c.b16 %v2323, %v2323
  %v2373 = vpack.c.b16 %v2324, %v2324
  %v2374 = vpack.c.b16 %v2325, %v2325
  %v2375 = vpack.c.b16 %v2326, %v2326
  %v2376 = vpack.c.b16 %v2327, %v2327
  %v2377 = vpack.c.b16 %v2328, %v2328
  %v2378 = vpack.c.b16 %v2329, %v2329
  %v2379 = vpack.c.b16 %v2330, %v2330
  %v2380 = vpack.c.b16 %v2331, %v2331
  %v2381 = vpack.c.b16 %v2332, %v2332
  %v2382 = vpack.c.b16 %v2333, %v2333
  %v2383 = vpack.c.b16 %v2334, %v2334
  %v2384 = vpack.c.b16 %v2335, %v2335
  %v2385 = vpack.c.b16 %v2336, %v2336
  %v2386 = vpack.c.b16 %v2337, %v2337
  %v2387 = vpack.c.b16 %v2338, %v2338
  %v2388 = vpack.c.b16 %v2339, %v2339
  %v2389 = vpack.c.b16 %v2340, %v2340
  %v2390 = vpack.c.b16 %v2341, %v2341
  %v2391 = vpack.c.b16 %v2342, %v2342
  %v2392 = vpack.c.b16 %v2343, %v2343
  %v2393 = vpack.c.b16 %v2344, %v2344
  %v2394 = vpack.c.b16 %v2345, %v2345
  %v2395 = vpack.c.b16 %v2346, %v2346
  %v2396 = vpack.c.b16 %v2347, %v2347
  %v2397 = vpack.c.b16 %v2348, %v2348
  %v2398 = vpack.c.b16 %v2349, %v2349
  %v2399 = vpack.c.b16 %v2350, %v2350
  %v2400 = vpack.c.b16 %v2351, %v2351
  %v2401 = vpack.c.b16 %v2352, %v2352
  %v2402 = vpack.c.b16 %v2353, %v2353
  %v2403 = vpack.c.b16 %v2354, %v2354
  %v2404 = vpack.c.b16 %v2355, %v2355
  %v2405 = vpack.c.b16 %v2356, %v2356
  %vm2455 = vcmask 257024
  %2456 = vst.msk [vmem:[%s3] sm:$0xf] %vm2455, %v2357
  %2457 = vst.msk [vmem:[%s3 + $0x4] sm:$0xf] %vm2455, %v2358
  %2458 = vst.msk [vmem:[%s3 + $0x8] sm:$0xf] %vm2455, %v2359
  %2459 = vst.msk [vmem:[%s3 + $0xc] sm:$0xf] %vm2455, %v2360
  %2460 = vst.msk [vmem:[%s3 + $0x10] sm:$0xf] %vm2455, %v2361
  %2461 = vst.msk [vmem:[%s3 + $0x14] sm:$0xf] %vm2455, %v2362
  %2462 = vst.msk [vmem:[%s3 + $0x18] sm:$0xf] %vm2455, %v2363
  %2463 = vst.msk [vmem:[%s3 + $0x1c] sm:$0xf] %vm2455, %v2364
  %2464 = vst.msk [vmem:[%s3 + $0x20] sm:$0xf] %vm2455, %v2365
  %2465 = vst.msk [vmem:[%s3 + $0x24] sm:$0xf] %vm2455, %v2366
  %2466 = vst.msk [vmem:[%s3 + $0x28] sm:$0xf] %vm2455, %v2367
  %2467 = vst.msk [vmem:[%s3 + $0x2c] sm:$0xf] %vm2455, %v2368
  %2468 = vst.msk [vmem:[%s3 + $0x30] sm:$0xf] %vm2455, %v2369
  %2469 = vst.msk [vmem:[%s3 + $0x34] sm:$0xf] %vm2455, %v2370
  %2470 = vst.msk [vmem:[%s3 + $0x38] sm:$0xf] %vm2455, %v2371
  %2471 = vst.msk [vmem:[%s3 + $0x3c] sm:$0xf] %vm2455, %v2372
  %2472 = vst.msk [vmem:[%s3 + $0x40] sm:$0xf] %vm2455, %v2373
  %2473 = vst.msk [vmem:[%s3 + $0x44] sm:$0xf] %vm2455, %v2374
  %2474 = vst.msk [vmem:[%s3 + $0x48] sm:$0xf] %vm2455, %v2375
  %2475 = vst.msk [vmem:[%s3 + $0x4c] sm:$0xf] %vm2455, %v2376
  %2476 = vst.msk [vmem:[%s3 + $0x50] sm:$0xf] %vm2455, %v2377
  %2477 = vst.msk [vmem:[%s3 + $0x54] sm:$0xf] %vm2455, %v2378
  %2478 = vst.msk [vmem:[%s3 + $0x58] sm:$0xf] %vm2455, %v2379
  %2479 = vst.msk [vmem:[%s3 + $0x5c] sm:$0xf] %vm2455, %v2380
  %2480 = vst.msk [vmem:[%s3 + $0x60] sm:$0xf] %vm2455, %v2381
  %2481 = vst.msk [vmem:[%s3 + $0x64] sm:$0xf] %vm2455, %v2382
  %2482 = vst.msk [vmem:[%s3 + $0x68] sm:$0xf] %vm2455, %v2383
  %2483 = vst.msk [vmem:[%s3 + $0x6c] sm:$0xf] %vm2455, %v2384
  %2484 = vst.msk [vmem:[%s3 + $0x70] sm:$0xf] %vm2455, %v2385
  %2485 = vst.msk [vmem:[%s3 + $0x74] sm:$0xf] %vm2455, %v2386
  %2486 = vst.msk [vmem:[%s3 + $0x78] sm:$0xf] %vm2455, %v2387
  %2487 = vst.msk [vmem:[%s3 + $0x7c] sm:$0xf] %vm2455, %v2388
  %2488 = vst.msk [vmem:[%s3 + $0x80] sm:$0xf] %vm2455, %v2389
  %2489 = vst.msk [vmem:[%s3 + $0x84] sm:$0xf] %vm2455, %v2390
  %2490 = vst.msk [vmem:[%s3 + $0x88] sm:$0xf] %vm2455, %v2391
  %2491 = vst.msk [vmem:[%s3 + $0x8c] sm:$0xf] %vm2455, %v2392
  %2492 = vst.msk [vmem:[%s3 + $0x90] sm:$0xf] %vm2455, %v2393
  %2493 = vst.msk [vmem:[%s3 + $0x94] sm:$0xf] %vm2455, %v2394
  %2494 = vst.msk [vmem:[%s3 + $0x98] sm:$0xf] %vm2455, %v2395
  %2495 = vst.msk [vmem:[%s3 + $0x9c] sm:$0xf] %vm2455, %v2396
  %2496 = vst.msk [vmem:[%s3 + $0xa0] sm:$0xf] %vm2455, %v2397
  %2497 = vst.msk [vmem:[%s3 + $0xa4] sm:$0xf] %vm2455, %v2398
  %2498 = vst.msk [vmem:[%s3 + $0xa8] sm:$0xf] %vm2455, %v2399
  %2499 = vst.msk [vmem:[%s3 + $0xac] sm:$0xf] %vm2455, %v2400
  %2500 = vst.msk [vmem:[%s3 + $0xb0] sm:$0xf] %vm2455, %v2401
  %2501 = vst.msk [vmem:[%s3 + $0xb4] sm:$0xf] %vm2455, %v2402
  %2502 = vst.msk [vmem:[%s3 + $0xb8] sm:$0xf] %vm2455, %v2403
  %2503 = vst.msk [vmem:[%s3 + $0xbc] sm:$0xf] %vm2455, %v2404
  %2504 = vst.msk [vmem:[%s3 + $0xc0] sm:$0xf] %vm2455, %v2405
  // Predicated region
  $region14: #{tpu_custom_call.1} parent=0 // pred_check
    _
  $region15: #{tpu_custom_call.1} parent=0 // pred_check_branch
    %2506 = sbr.rel (0) target = $region17
  $region16: #{tpu_custom_call.1} parent=0 // pred_region
    _
  $region17: #{tpu_custom_call.1} parent=0 // pred_fallthru
    _
  // Predicated region
  $region18: #{tpu_custom_call.1} parent=0 // pred_check
    _
  $region19: #{tpu_custom_call.1} parent=0 // pred_check_branch
    %2508 = sbr.rel (0) target = $region21
  $region20: #{tpu_custom_call.1} parent=0 // pred_region
    _
  $region21: #{tpu_custom_call.1} parent=0 // pred_fallthru
    _

</llo_original>
